<compile_context>
chip_gen: v6e
topology: v6e:2x2x1
jax: 0.10.0
libtpu: 0.0.40
codegen_flags: <defaults>
</compile_context>

<pallas_src>
from functools import partial

import jax
import jax.numpy as jnp
from jax.experimental import pallas as pl
from jax.experimental.pallas import tpu as pltpu


# ----------------------------------------------------------------------------
# Fused transformer-encoder kernel
# ----------------------------------------------------------------------------

def _encoder_kernel(x_ref, pos_ref,
                    ln1g_ref, ln1b_ref, wqkv_ref, wproj_ref, bproj_ref,
                    ln2g_ref, ln2b_ref, wfc1_ref, bfc1_ref, wfc2_ref, bfc2_ref,
                    o_ref, acc_ref, *, num_heads):
    """One grid step = one (batch row, block depth) pair.

    acc_ref (VMEM scratch, f32) holds the residual stream for the current
    batch row across the depth iterations.
    """
    d = pl.program_id(1)

    # Initialize the residual stream from the input at the first block.
    @pl.when(d == 0)
    def _():
        acc_ref[...] = x_ref[...].astype(acc_ref.dtype)

    def layer_norm(v, g, b):
        mu = jnp.mean(v, axis=-1, keepdims=True)
        vc = v - mu
        var = jnp.mean(vc * vc, axis=-1, keepdims=True)
        return vc * jax.lax.rsqrt(var + 1e-5) * g + b

    # x = block(x + pos): pos is re-added before every block.
    h = acc_ref[0] + pos_ref[0].astype(jnp.float32)          # (S, D), f32
    S, D = h.shape
    H = num_heads
    hd = D // H
    scale = hd ** -0.5

    # ----- attention sub-block -----
    a = layer_norm(h, ln1g_ref[0], ln1b_ref[0])               # f32
    qkv = jnp.dot(a.astype(jnp.bfloat16), wqkv_ref[0],
                  preferred_element_type=jnp.float32)         # (S, 3D), f32 acc
    heads = []
    for hh in range(H):                                       # unrolled, stays in VMEM
        q = qkv[:, hh * hd:(hh + 1) * hd]
        k = qkv[:, D + hh * hd:D + (hh + 1) * hd]
        v = qkv[:, 2 * D + hh * hd:2 * D + (hh + 1) * hd]
        s = jax.lax.dot_general(q, k, (((1,), (1,)), ((), ())),
                                preferred_element_type=jnp.float32) * scale
        s = s - jnp.max(s, axis=-1, keepdims=True)
        p = jnp.exp(s)
        p = p * pl.reciprocal(jnp.sum(p, axis=-1, keepdims=True), approx=True)
        heads.append(jnp.dot(p.astype(jnp.bfloat16), v.astype(jnp.bfloat16),
                             preferred_element_type=jnp.float32))
    attn = jnp.concatenate(heads, axis=-1)                    # (S, D)
    attn = jnp.dot(attn.astype(jnp.bfloat16), wproj_ref[0],
                   preferred_element_type=jnp.float32) + bproj_ref[0]
    h = h + attn                                              # residual (f32)

    # ----- MLP sub-block -----
    m = layer_norm(h, ln2g_ref[0], ln2b_ref[0])
    u = jnp.dot(m.astype(jnp.bfloat16), wfc1_ref[0],
                preferred_element_type=jnp.float32) + bfc1_ref[0]
    # TODO(synk): torch nn.GELU uses exact erf; tanh approximation used here.
    u = jax.nn.gelu(u, approximate=True)
    u = jnp.dot(u.astype(jnp.bfloat16), wfc2_ref[0],
                preferred_element_type=jnp.float32) + bfc2_ref[0]
    h = h + u                                                 # residual (f32)

    acc_ref[0] = h

    # Write the output only after the last block for this batch row.
    @pl.when(d == pl.num_programs(1) - 1)
    def _():
        o_ref[...] = acc_ref[...].astype(o_ref.dtype)


def transformer_encoder(x, pos, blocks, *, num_heads):
    """x, pos: (B, S, D) float32; blocks: list of per-block param dicts."""
    B, S, D = x.shape
    depth = len(blocks)
    Dh = blocks[0]["w_fc1"].shape[1]
    assert D % num_heads == 0

    def stack(name):
        return jnp.stack([b[name] for b in blocks], axis=0)

    # Matmul weights -> bf16 (MXU fast path, halves HBM/VMEM traffic).
    w_qkv = stack("w_qkv").astype(jnp.bfloat16)       # (depth, D, 3D)
    w_proj = stack("w_proj").astype(jnp.bfloat16)     # (depth, D, D)
    w_fc1 = stack("w_fc1").astype(jnp.bfloat16)       # (depth, D, Dh)
    w_fc2 = stack("w_fc2").astype(jnp.bfloat16)       # (depth, Dh, D)

    # LN params and biases stay f32 (added after f32 accumulation).
    def vec(name):
        return stack(name).reshape(depth, 1, -1).astype(jnp.float32)

    ln1_g, ln1_b = vec("ln1_g"), vec("ln1_b")
    b_proj = vec("b_proj")
    ln2_g, ln2_b = vec("ln2_g"), vec("ln2_b")
    b_fc1, b_fc2 = vec("b_fc1"), vec("b_fc2")

    row = lambda i, d: (i, 0, 0)        # per-batch-row blocks (constant over depth)
    per_depth = lambda i, d: (d, 0, 0)  # per-block weights

    return pl.pallas_call(
        partial(_encoder_kernel, num_heads=num_heads),
        out_shape=jax.ShapeDtypeStruct((B, S, D), jnp.float32),
        grid_spec=pltpu.PrefetchScalarGridSpec(
            num_scalar_prefetch=0,
            grid=(B, depth),
            in_specs=[
                pl.BlockSpec((1, S, D), row),            # x
                pl.BlockSpec((1, S, D), row),            # pos
                pl.BlockSpec((1, 1, D), per_depth),      # ln1_g
                pl.BlockSpec((1, 1, D), per_depth),      # ln1_b
                pl.BlockSpec((1, D, 3 * D), per_depth),  # w_qkv
                pl.BlockSpec((1, D, D), per_depth),      # w_proj
                pl.BlockSpec((1, 1, D), per_depth),      # b_proj
                pl.BlockSpec((1, 1, D), per_depth),      # ln2_g
                pl.BlockSpec((1, 1, D), per_depth),      # ln2_b
                pl.BlockSpec((1, D, Dh), per_depth),     # w_fc1
                pl.BlockSpec((1, 1, Dh), per_depth),     # b_fc1
                pl.BlockSpec((1, Dh, D), per_depth),     # w_fc2
                pl.BlockSpec((1, 1, D), per_depth),      # b_fc2
            ],
            out_specs=pl.BlockSpec((1, S, D), row),
            scratch_shapes=[pltpu.VMEM((1, S, D), jnp.float32)]),
        compiler_params=pltpu.CompilerParams(
            dimension_semantics=("parallel", "arbitrary")),
    )(x.astype(jnp.float32), pos.astype(jnp.float32),
      ln1_g, ln1_b, w_qkv, w_proj, b_proj, ln2_g, ln2_b,
      w_fc1, b_fc1, w_fc2, b_fc2)


# ----------------------------------------------------------------------------
# Pure-JAX reference (f32) for correctness checking
# ----------------------------------------------------------------------------

def encoder_reference(x, pos, blocks, num_heads):
    B, S, D = x.shape
    H = num_heads
    hd = D // H

    def ln(v, g, b):
        mu = jnp.mean(v, axis=-1, keepdims=True)
        vc = v - mu
        var = jnp.mean(vc * vc, axis=-1, keepdims=True)
        return vc * jax.lax.rsqrt(var + 1e-5) * g + b

    for blk in blocks:
        h = x + pos
        a = ln(h, blk["ln1_g"], blk["ln1_b"])
        qkv = a @ blk["w_qkv"]
        qkv = qkv.reshape(B, S, 3, H, hd).transpose(2, 0, 3, 1, 4)  # (3,B,H,S,hd)
        q, k, v = qkv[0], qkv[1], qkv[2]
        s = jnp.einsum("bhqd,bhkd->bhqk", q, k) * (hd ** -0.5)
        p = jax.nn.softmax(s, axis=-1)
        o = jnp.einsum("bhqk,bhkd->bhqd", p, v)
        o = o.transpose(0, 2, 1, 3).reshape(B, S, D)
        h = h + o @ blk["w_proj"] + blk["b_proj"]
        m = ln(h, blk["ln2_g"], blk["ln2_b"])
        m = jax.nn.gelu(m @ blk["w_fc1"] + blk["b_fc1"], approximate=True)
        x = h + m @ blk["w_fc2"] + blk["b_fc2"]
    return x


# ----------------------------------------------------------------------------
# Deterministic parameter init (shapes follow the module __init__, scaled down)
# ----------------------------------------------------------------------------

def init_blocks(key, depth, D, Dh):
    keys = jax.random.split(key, depth * 8)
    blocks = []
    for i in range(depth):
        k = keys[8 * i:8 * (i + 1)]
        blocks.append(dict(
            ln1_g=1.0 + 0.02 * jax.random.normal(k[0], (D,), jnp.float32),
            ln1_b=0.02 * jax.random.normal(k[1], (D,), jnp.float32),
            w_qkv=0.02 * jax.random.normal(k[2], (D, 3 * D), jnp.float32),
            w_proj=0.02 * jax.random.normal(k[3], (D, D), jnp.float32),
            b_proj=0.01 * jax.random.normal(k[4], (D,), jnp.float32),
            ln2_g=1.0 + 0.02 * jax.random.normal(k[5], (D,), jnp.float32),
            ln2_b=0.02 * jax.random.normal(k[6], (D,), jnp.float32),
            w_fc1=0.02 * jax.random.normal(k[7], (D, Dh), jnp.float32),
            b_fc1=jnp.zeros((Dh,), jnp.float32),
            w_fc2=0.02 * jax.random.normal(k[2], (Dh, D), jnp.float32),
            b_fc2=jnp.zeros((D,), jnp.float32),
        ))
    return blocks


# ----------------------------------------------------------------------------
# Main
# ----------------------------------------------------------------------------

if __name__ == "__main__":
    # Small config consistent with the module (embed_dim=768, depth=4,
    # num_heads=12 in the original; scaled down for a quick test).
    B, S, D = 2, 16, 128
    DEPTH, NUM_HEADS, MLP_RATIO = 4, 4, 4.0
    Dh = int(D * MLP_RATIO)

    key = jax.random.PRNGKey(0)
    kx, kp, kw = jax.random.split(key, 3)
    x = jax.random.normal(kx, (B, S, D), dtype=jnp.float32)
    pos = 0.1 * jax.random.normal(kp, (B, S, D), dtype=jnp.float32)
    blocks = init_blocks(kw, DEPTH, D, Dh)

    fwd = jax.jit(partial(transformer_encoder, num_heads=NUM_HEADS))
    out = jax.block_until_ready(fwd(x, pos, blocks))

    ref = encoder_reference(x, pos, blocks, NUM_HEADS)

    assert out.shape == (B, S, D)
    assert bool(jnp.all(jnp.isfinite(out)))
    max_err = float(jnp.max(jnp.abs(out - ref)))
    assert max_err < 5e-2, f"max abs err vs f32 reference = {max_err}"

    print("KERNEL_OK")
</pallas_src>

<mosaic_0001>
module attributes {stable_mosaic.version = 11 : i64} {
  func.func @_encoder_kernel(%arg0: i32, %arg1: i32, %arg2: memref<1x16x128xf32, #tpu.memory_space<vmem>>, %arg3: memref<1x16x128xf32, #tpu.memory_space<vmem>>, %arg4: memref<1x1x128xf32, #tpu.memory_space<vmem>>, %arg5: memref<1x1x128xf32, #tpu.memory_space<vmem>>, %arg6: memref<1x128x384xbf16, #tpu.memory_space<vmem>>, %arg7: memref<1x128x128xbf16, #tpu.memory_space<vmem>>, %arg8: memref<1x1x128xf32, #tpu.memory_space<vmem>>, %arg9: memref<1x1x128xf32, #tpu.memory_space<vmem>>, %arg10: memref<1x1x128xf32, #tpu.memory_space<vmem>>, %arg11: memref<1x128x512xbf16, #tpu.memory_space<vmem>>, %arg12: memref<1x1x512xf32, #tpu.memory_space<vmem>>, %arg13: memref<1x512x128xbf16, #tpu.memory_space<vmem>>, %arg14: memref<1x1x128xf32, #tpu.memory_space<vmem>>, %arg15: memref<1x16x128xf32, #tpu.memory_space<vmem>>, %arg16: memref<1x16x128xf32, #tpu.memory_space<vmem>>) attributes {dimension_semantics = [#tpu.dimension_semantics<parallel>, #tpu.dimension_semantics<arbitrary>], iteration_bounds = array<i64: 2, 4>, scalar_prefetch = 0 : i64, scratch_operands = 1 : i64, tpu.core_type = #tpu.core_type<tc>, window_params = [{transform_indices = @transform_0, window_bounds = array<i64: 1, 16, 128>}, {transform_indices = @transform_1, window_bounds = array<i64: 1, 16, 128>}, {transform_indices = @transform_2, window_bounds = array<i64: 1, 1, 128>}, {transform_indices = @transform_3, window_bounds = array<i64: 1, 1, 128>}, {transform_indices = @transform_4, window_bounds = array<i64: 1, 128, 384>}, {transform_indices = @transform_5, window_bounds = array<i64: 1, 128, 128>}, {transform_indices = @transform_6, window_bounds = array<i64: 1, 1, 128>}, {transform_indices = @transform_7, window_bounds = array<i64: 1, 1, 128>}, {transform_indices = @transform_8, window_bounds = array<i64: 1, 1, 128>}, {transform_indices = @transform_9, window_bounds = array<i64: 1, 128, 512>}, {transform_indices = @transform_10, window_bounds = array<i64: 1, 1, 512>}, {transform_indices = @transform_11, window_bounds = array<i64: 1, 512, 128>}, {transform_indices = @transform_12, window_bounds = array<i64: 1, 1, 128>}, {transform_indices = @transform_13, window_bounds = array<i64: 1, 16, 128>}]} {
    %c0_i32 = arith.constant 0 : i32
    %0 = arith.cmpi eq, %arg1, %c0_i32 : i32
    %1 = arith.extui %0 : i1 to i32
    %c0_i32_0 = arith.constant 0 : i32
    %2 = arith.cmpi ne, %1, %c0_i32_0 : i32
    scf.if %2 {
      %c0_80 = arith.constant 0 : index
      %c0_81 = arith.constant 0 : index
      %c0_82 = arith.constant 0 : index
      %182 = vector.load %arg2[%c0_80, %c0_81, %c0_82] : memref<1x16x128xf32, #tpu.memory_space<vmem>>, vector<1x16x128xf32>
      %c0_83 = arith.constant 0 : index
      %c0_84 = arith.constant 0 : index
      %c0_85 = arith.constant 0 : index
      %183 = vector.load %arg16[%c0_83, %c0_84, %c0_85] : memref<1x16x128xf32, #tpu.memory_space<vmem>>, vector<1x16x128xf32>
      tpu.vector_store %arg16[%c0_83, %c0_84, %c0_85], %182 {strides = array<i32>} : memref<1x16x128xf32, #tpu.memory_space<vmem>>, vector<1x16x128xf32>,
    } else {
    }
    %c0 = arith.constant 0 : index
    %c0_1 = arith.constant 0 : index
    %c0_2 = arith.constant 0 : index
    %3 = vector.load %arg16[%c0, %c0_1, %c0_2] : memref<1x16x128xf32, #tpu.memory_space<vmem>>, vector<1x16x128xf32>
    %4 = vector.shape_cast %3 : vector<1x16x128xf32> to vector<16x128xf32>
    %c0_3 = arith.constant 0 : index
    %c0_4 = arith.constant 0 : index
    %c0_5 = arith.constant 0 : index
    %5 = vector.load %arg3[%c0_3, %c0_4, %c0_5] : memref<1x16x128xf32, #tpu.memory_space<vmem>>, vector<1x16x128xf32>
    %6 = vector.shape_cast %5 : vector<1x16x128xf32> to vector<16x128xf32>
    %7 = arith.addf %4, %6 : vector<16x128xf32>
    %c0_6 = arith.constant 0 : index
    %c0_7 = arith.constant 0 : index
    %c0_8 = arith.constant 0 : index
    %8 = vector.load %arg4[%c0_6, %c0_7, %c0_8] : memref<1x1x128xf32, #tpu.memory_space<vmem>>, vector<1x1x128xf32>
    %9 = vector.shape_cast %8 : vector<1x1x128xf32> to vector<1x128xf32>
    %c0_9 = arith.constant 0 : index
    %c0_10 = arith.constant 0 : index
    %c0_11 = arith.constant 0 : index
    %10 = vector.load %arg5[%c0_9, %c0_10, %c0_11] : memref<1x1x128xf32, #tpu.memory_space<vmem>>, vector<1x1x128xf32>
    %11 = vector.shape_cast %10 : vector<1x1x128xf32> to vector<1x128xf32>
    %cst = arith.constant dense<0.000000e+00> : vector<16xf32>
    %12 = vector.multi_reduction <add>, %7, %cst [1] : vector<16x128xf32> to vector<16xf32>
    %13 = vector.shape_cast %12 : vector<16xf32> to vector<16x1xf32>
    %cst_12 = arith.constant 1.280000e+02 : f32
    %14 = vector.broadcast %cst_12 : f32 to vector<16x1xf32>
    %15 = arith.divf %13, %14 : vector<16x1xf32>
    %16 = vector.broadcast %15 : vector<16x1xf32> to vector<16x128xf32>
    %17 = arith.subf %7, %16 : vector<16x128xf32>
    %18 = arith.mulf %17, %17 : vector<16x128xf32>
    %cst_13 = arith.constant dense<0.000000e+00> : vector<16xf32>
    %19 = vector.multi_reduction <add>, %18, %cst_13 [1] : vector<16x128xf32> to vector<16xf32>
    %20 = vector.shape_cast %19 : vector<16xf32> to vector<16x1xf32>
    %cst_14 = arith.constant 1.280000e+02 : f32
    %21 = vector.broadcast %cst_14 : f32 to vector<16x1xf32>
    %22 = arith.divf %20, %21 : vector<16x1xf32>
    %cst_15 = arith.constant 9.99999974E-6 : f32
    %23 = vector.broadcast %cst_15 : f32 to vector<16x1xf32>
    %24 = arith.addf %22, %23 : vector<16x1xf32>
    %25 = math.rsqrt %24 : vector<16x1xf32>
    %26 = vector.broadcast %25 : vector<16x1xf32> to vector<16x128xf32>
    %27 = arith.mulf %17, %26 : vector<16x128xf32>
    %28 = vector.broadcast %9 : vector<1x128xf32> to vector<16x128xf32>
    %29 = arith.mulf %27, %28 : vector<16x128xf32>
    %30 = vector.broadcast %11 : vector<1x128xf32> to vector<16x128xf32>
    %31 = arith.addf %29, %30 : vector<16x128xf32>
    %32 = arith.truncf %31 : vector<16x128xf32> to vector<16x128xbf16>
    %c0_16 = arith.constant 0 : index
    %c0_17 = arith.constant 0 : index
    %c0_18 = arith.constant 0 : index
    %33 = vector.load %arg6[%c0_16, %c0_17, %c0_18] : memref<1x128x384xbf16, #tpu.memory_space<vmem>>, vector<1x128x384xbf16>
    %34 = vector.shape_cast %33 : vector<1x128x384xbf16> to vector<128x384xbf16>
    %cst_19 = arith.constant dense<0.000000e+00> : vector<16x384xf32>
    %35 = tpu.matmul %32, %34, %cst_19 {dimension_numbers = #tpu.dot_dimension_numbers<[1], [0], [0], [1], [0, 0, 1, 1], [], []>} : vector<16x128xbf16>, vector<128x384xbf16>, vector<16x384xf32> -> vector<16x384xf32>
    %36 = vector.extract_strided_slice %35 {offsets = [0, 0], sizes = [16, 32], strides = [1, 1]} : vector<16x384xf32> to vector<16x32xf32>
    %37 = vector.extract_strided_slice %35 {offsets = [0, 128], sizes = [16, 32], strides = [1, 1]} : vector<16x384xf32> to vector<16x32xf32>
    %38 = vector.extract_strided_slice %35 {offsets = [0, 256], sizes = [16, 32], strides = [1, 1]} : vector<16x384xf32> to vector<16x32xf32>
    %cst_20 = arith.constant dense<0.000000e+00> : vector<16x16xf32>
    %39 = tpu.matmul %36, %37, %cst_20 {dimension_numbers = #tpu.dot_dimension_numbers<[1], [1], [0], [0], [0, 0, 1, 0], [], []>} : vector<16x32xf32>, vector<16x32xf32>, vector<16x16xf32> -> vector<16x16xf32>
    %cst_21 = arith.constant 0.176776692 : f32
    %40 = vector.broadcast %cst_21 : f32 to vector<16x16xf32>
    %41 = arith.mulf %39, %40 : vector<16x16xf32>
    %cst_22 = arith.constant dense<0xFF800000> : vector<16xf32>
    %42 = vector.multi_reduction <maximumf>, %41, %cst_22 [1] : vector<16x16xf32> to vector<16xf32>
    %43 = vector.shape_cast %42 : vector<16xf32> to vector<16x1xf32>
    %44 = vector.broadcast %43 : vector<16x1xf32> to vector<16x16xf32>
    %45 = arith.subf %41, %44 : vector<16x16xf32>
    %46 = math.exp %45 : vector<16x16xf32>
    %cst_23 = arith.constant dense<0.000000e+00> : vector<16xf32>
    %47 = vector.multi_reduction <add>, %46, %cst_23 [1] : vector<16x16xf32> to vector<16xf32>
    %48 = vector.shape_cast %47 : vector<16xf32> to vector<16x1xf32>
    %49 = tpu.reciprocal %48 {approx = true} : vector<16x1xf32> -> vector<16x1xf32>
    %50 = vector.broadcast %49 : vector<16x1xf32> to vector<16x16xf32>
    %51 = arith.mulf %46, %50 : vector<16x16xf32>
    %52 = arith.truncf %51 : vector<16x16xf32> to vector<16x16xbf16>
    %53 = arith.truncf %38 : vector<16x32xf32> to vector<16x32xbf16>
    %cst_24 = arith.constant dense<0.000000e+00> : vector<16x32xf32>
    %54 = tpu.matmul %52, %53, %cst_24 {dimension_numbers = #tpu.dot_dimension_numbers<[1], [0], [0], [1], [0, 0, 1, 1], [], []>} : vector<16x16xbf16>, vector<16x32xbf16>, vector<16x32xf32> -> vector<16x32xf32>
    %55 = vector.extract_strided_slice %35 {offsets = [0, 32], sizes = [16, 32], strides = [1, 1]} : vector<16x384xf32> to vector<16x32xf32>
    %56 = vector.extract_strided_slice %35 {offsets = [0, 160], sizes = [16, 32], strides = [1, 1]} : vector<16x384xf32> to vector<16x32xf32>
    %57 = vector.extract_strided_slice %35 {offsets = [0, 288], sizes = [16, 32], strides = [1, 1]} : vector<16x384xf32> to vector<16x32xf32>
    %cst_25 = arith.constant dense<0.000000e+00> : vector<16x16xf32>
    %58 = tpu.matmul %55, %56, %cst_25 {dimension_numbers = #tpu.dot_dimension_numbers<[1], [1], [0], [0], [0, 0, 1, 0], [], []>} : vector<16x32xf32>, vector<16x32xf32>, vector<16x16xf32> -> vector<16x16xf32>
    %cst_26 = arith.constant 0.176776692 : f32
    %59 = vector.broadcast %cst_26 : f32 to vector<16x16xf32>
    %60 = arith.mulf %58, %59 : vector<16x16xf32>
    %cst_27 = arith.constant dense<0xFF800000> : vector<16xf32>
    %61 = vector.multi_reduction <maximumf>, %60, %cst_27 [1] : vector<16x16xf32> to vector<16xf32>
    %62 = vector.shape_cast %61 : vector<16xf32> to vector<16x1xf32>
    %63 = vector.broadcast %62 : vector<16x1xf32> to vector<16x16xf32>
    %64 = arith.subf %60, %63 : vector<16x16xf32>
    %65 = math.exp %64 : vector<16x16xf32>
    %cst_28 = arith.constant dense<0.000000e+00> : vector<16xf32>
    %66 = vector.multi_reduction <add>, %65, %cst_28 [1] : vector<16x16xf32> to vector<16xf32>
    %67 = vector.shape_cast %66 : vector<16xf32> to vector<16x1xf32>
    %68 = tpu.reciprocal %67 {approx = true} : vector<16x1xf32> -> vector<16x1xf32>
    %69 = vector.broadcast %68 : vector<16x1xf32> to vector<16x16xf32>
    %70 = arith.mulf %65, %69 : vector<16x16xf32>
    %71 = arith.truncf %70 : vector<16x16xf32> to vector<16x16xbf16>
    %72 = arith.truncf %57 : vector<16x32xf32> to vector<16x32xbf16>
    %cst_29 = arith.constant dense<0.000000e+00> : vector<16x32xf32>
    %73 = tpu.matmul %71, %72, %cst_29 {dimension_numbers = #tpu.dot_dimension_numbers<[1], [0], [0], [1], [0, 0, 1, 1], [], []>} : vector<16x16xbf16>, vector<16x32xbf16>, vector<16x32xf32> -> vector<16x32xf32>
    %74 = vector.extract_strided_slice %35 {offsets = [0, 64], sizes = [16, 32], strides = [1, 1]} : vector<16x384xf32> to vector<16x32xf32>
    %75 = vector.extract_strided_slice %35 {offsets = [0, 192], sizes = [16, 32], strides = [1, 1]} : vector<16x384xf32> to vector<16x32xf32>
    %76 = vector.extract_strided_slice %35 {offsets = [0, 320], sizes = [16, 32], strides = [1, 1]} : vector<16x384xf32> to vector<16x32xf32>
    %cst_30 = arith.constant dense<0.000000e+00> : vector<16x16xf32>
    %77 = tpu.matmul %74, %75, %cst_30 {dimension_numbers = #tpu.dot_dimension_numbers<[1], [1], [0], [0], [0, 0, 1, 0], [], []>} : vector<16x32xf32>, vector<16x32xf32>, vector<16x16xf32> -> vector<16x16xf32>
    %cst_31 = arith.constant 0.176776692 : f32
    %78 = vector.broadcast %cst_31 : f32 to vector<16x16xf32>
    %79 = arith.mulf %77, %78 : vector<16x16xf32>
    %cst_32 = arith.constant dense<0xFF800000> : vector<16xf32>
    %80 = vector.multi_reduction <maximumf>, %79, %cst_32 [1] : vector<16x16xf32> to vector<16xf32>
    %81 = vector.shape_cast %80 : vector<16xf32> to vector<16x1xf32>
    %82 = vector.broadcast %81 : vector<16x1xf32> to vector<16x16xf32>
    %83 = arith.subf %79, %82 : vector<16x16xf32>
    %84 = math.exp %83 : vector<16x16xf32>
    %cst_33 = arith.constant dense<0.000000e+00> : vector<16xf32>
    %85 = vector.multi_reduction <add>, %84, %cst_33 [1] : vector<16x16xf32> to vector<16xf32>
    %86 = vector.shape_cast %85 : vector<16xf32> to vector<16x1xf32>
    %87 = tpu.reciprocal %86 {approx = true} : vector<16x1xf32> -> vector<16x1xf32>
    %88 = vector.broadcast %87 : vector<16x1xf32> to vector<16x16xf32>
    %89 = arith.mulf %84, %88 : vector<16x16xf32>
    %90 = arith.truncf %89 : vector<16x16xf32> to vector<16x16xbf16>
    %91 = arith.truncf %76 : vector<16x32xf32> to vector<16x32xbf16>
    %cst_34 = arith.constant dense<0.000000e+00> : vector<16x32xf32>
    %92 = tpu.matmul %90, %91, %cst_34 {dimension_numbers = #tpu.dot_dimension_numbers<[1], [0], [0], [1], [0, 0, 1, 1], [], []>} : vector<16x16xbf16>, vector<16x32xbf16>, vector<16x32xf32> -> vector<16x32xf32>
    %93 = vector.extract_strided_slice %35 {offsets = [0, 96], sizes = [16, 32], strides = [1, 1]} : vector<16x384xf32> to vector<16x32xf32>
    %94 = vector.extract_strided_slice %35 {offsets = [0, 224], sizes = [16, 32], strides = [1, 1]} : vector<16x384xf32> to vector<16x32xf32>
    %95 = vector.extract_strided_slice %35 {offsets = [0, 352], sizes = [16, 32], strides = [1, 1]} : vector<16x384xf32> to vector<16x32xf32>
    %cst_35 = arith.constant dense<0.000000e+00> : vector<16x16xf32>
    %96 = tpu.matmul %93, %94, %cst_35 {dimension_numbers = #tpu.dot_dimension_numbers<[1], [1], [0], [0], [0, 0, 1, 0], [], []>} : vector<16x32xf32>, vector<16x32xf32>, vector<16x16xf32> -> vector<16x16xf32>
    %cst_36 = arith.constant 0.176776692 : f32
    %97 = vector.broadcast %cst_36 : f32 to vector<16x16xf32>
    %98 = arith.mulf %96, %97 : vector<16x16xf32>
    %cst_37 = arith.constant dense<0xFF800000> : vector<16xf32>
    %99 = vector.multi_reduction <maximumf>, %98, %cst_37 [1] : vector<16x16xf32> to vector<16xf32>
    %100 = vector.shape_cast %99 : vector<16xf32> to vector<16x1xf32>
    %101 = vector.broadcast %100 : vector<16x1xf32> to vector<16x16xf32>
    %102 = arith.subf %98, %101 : vector<16x16xf32>
    %103 = math.exp %102 : vector<16x16xf32>
    %cst_38 = arith.constant dense<0.000000e+00> : vector<16xf32>
    %104 = vector.multi_reduction <add>, %103, %cst_38 [1] : vector<16x16xf32> to vector<16xf32>
    %105 = vector.shape_cast %104 : vector<16xf32> to vector<16x1xf32>
    %106 = tpu.reciprocal %105 {approx = true} : vector<16x1xf32> -> vector<16x1xf32>
    %107 = vector.broadcast %106 : vector<16x1xf32> to vector<16x16xf32>
    %108 = arith.mulf %103, %107 : vector<16x16xf32>
    %109 = arith.truncf %108 : vector<16x16xf32> to vector<16x16xbf16>
    %110 = arith.truncf %95 : vector<16x32xf32> to vector<16x32xbf16>
    %cst_39 = arith.constant dense<0.000000e+00> : vector<16x32xf32>
    %111 = tpu.matmul %109, %110, %cst_39 {dimension_numbers = #tpu.dot_dimension_numbers<[1], [0], [0], [1], [0, 0, 1, 1], [], []>} : vector<16x16xbf16>, vector<16x32xbf16>, vector<16x32xf32> -> vector<16x32xf32>
    %112 = tpu.concatenate %54, %73, %92, %111 in 1 : vector<16x32xf32>, vector<16x32xf32>, vector<16x32xf32>, vector<16x32xf32> -> vector<16x128xf32>
    %113 = arith.truncf %112 : vector<16x128xf32> to vector<16x128xbf16>
    %c0_40 = arith.constant 0 : index
    %c0_41 = arith.constant 0 : index
    %c0_42 = arith.constant 0 : index
    %114 = vector.load %arg7[%c0_40, %c0_41, %c0_42] : memref<1x128x128xbf16, #tpu.memory_space<vmem>>, vector<1x128x128xbf16>
    %115 = vector.shape_cast %114 : vector<1x128x128xbf16> to vector<128x128xbf16>
    %cst_43 = arith.constant dense<0.000000e+00> : vector<16x128xf32>
    %116 = tpu.matmul %113, %115, %cst_43 {dimension_numbers = #tpu.dot_dimension_numbers<[1], [0], [0], [1], [0, 0, 1, 1], [], []>} : vector<16x128xbf16>, vector<128x128xbf16>, vector<16x128xf32> -> vector<16x128xf32>
    %c0_44 = arith.constant 0 : index
    %c0_45 = arith.constant 0 : index
    %c0_46 = arith.constant 0 : index
    %117 = vector.load %arg8[%c0_44, %c0_45, %c0_46] : memref<1x1x128xf32, #tpu.memory_space<vmem>>, vector<1x1x128xf32>
    %118 = vector.shape_cast %117 : vector<1x1x128xf32> to vector<1x128xf32>
    %119 = vector.broadcast %118 : vector<1x128xf32> to vector<16x128xf32>
    %120 = arith.addf %116, %119 : vector<16x128xf32>
    %121 = arith.addf %7, %120 : vector<16x128xf32>
    %c0_47 = arith.constant 0 : index
    %c0_48 = arith.constant 0 : index
    %c0_49 = arith.constant 0 : index
    %122 = vector.load %arg9[%c0_47, %c0_48, %c0_49] : memref<1x1x128xf32, #tpu.memory_space<vmem>>, vector<1x1x128xf32>
    %123 = vector.shape_cast %122 : vector<1x1x128xf32> to vector<1x128xf32>
    %c0_50 = arith.constant 0 : index
    %c0_51 = arith.constant 0 : index
    %c0_52 = arith.constant 0 : index
    %124 = vector.load %arg10[%c0_50, %c0_51, %c0_52] : memref<1x1x128xf32, #tpu.memory_space<vmem>>, vector<1x1x128xf32>
    %125 = vector.shape_cast %124 : vector<1x1x128xf32> to vector<1x128xf32>
    %cst_53 = arith.constant dense<0.000000e+00> : vector<16xf32>
    %126 = vector.multi_reduction <add>, %121, %cst_53 [1] : vector<16x128xf32> to vector<16xf32>
    %127 = vector.shape_cast %126 : vector<16xf32> to vector<16x1xf32>
    %cst_54 = arith.constant 1.280000e+02 : f32
    %128 = vector.broadcast %cst_54 : f32 to vector<16x1xf32>
    %129 = arith.divf %127, %128 : vector<16x1xf32>
    %130 = vector.broadcast %129 : vector<16x1xf32> to vector<16x128xf32>
    %131 = arith.subf %121, %130 : vector<16x128xf32>
    %132 = arith.mulf %131, %131 : vector<16x128xf32>
    %cst_55 = arith.constant dense<0.000000e+00> : vector<16xf32>
    %133 = vector.multi_reduction <add>, %132, %cst_55 [1] : vector<16x128xf32> to vector<16xf32>
    %134 = vector.shape_cast %133 : vector<16xf32> to vector<16x1xf32>
    %cst_56 = arith.constant 1.280000e+02 : f32
    %135 = vector.broadcast %cst_56 : f32 to vector<16x1xf32>
    %136 = arith.divf %134, %135 : vector<16x1xf32>
    %cst_57 = arith.constant 9.99999974E-6 : f32
    %137 = vector.broadcast %cst_57 : f32 to vector<16x1xf32>
    %138 = arith.addf %136, %137 : vector<16x1xf32>
    %139 = math.rsqrt %138 : vector<16x1xf32>
    %140 = vector.broadcast %139 : vector<16x1xf32> to vector<16x128xf32>
    %141 = arith.mulf %131, %140 : vector<16x128xf32>
    %142 = vector.broadcast %123 : vector<1x128xf32> to vector<16x128xf32>
    %143 = arith.mulf %141, %142 : vector<16x128xf32>
    %144 = vector.broadcast %125 : vector<1x128xf32> to vector<16x128xf32>
    %145 = arith.addf %143, %144 : vector<16x128xf32>
    %146 = arith.truncf %145 : vector<16x128xf32> to vector<16x128xbf16>
    %c0_58 = arith.constant 0 : index
    %c0_59 = arith.constant 0 : index
    %c0_60 = arith.constant 0 : index
    %147 = vector.load %arg11[%c0_58, %c0_59, %c0_60] : memref<1x128x512xbf16, #tpu.memory_space<vmem>>, vector<1x128x512xbf16>
    %148 = vector.shape_cast %147 : vector<1x128x512xbf16> to vector<128x512xbf16>
    %cst_61 = arith.constant dense<0.000000e+00> : vector<16x512xf32>
    %149 = tpu.matmul %146, %148, %cst_61 {dimension_numbers = #tpu.dot_dimension_numbers<[1], [0], [0], [1], [0, 0, 1, 1], [], []>} : vector<16x128xbf16>, vector<128x512xbf16>, vector<16x512xf32> -> vector<16x512xf32>
    %c0_62 = arith.constant 0 : index
    %c0_63 = arith.constant 0 : index
    %c0_64 = arith.constant 0 : index
    %150 = vector.load %arg12[%c0_62, %c0_63, %c0_64] : memref<1x1x512xf32, #tpu.memory_space<vmem>>, vector<1x1x512xf32>
    %151 = vector.shape_cast %150 : vector<1x1x512xf32> to vector<1x512xf32>
    %152 = vector.broadcast %151 : vector<1x512xf32> to vector<16x512xf32>
    %153 = arith.addf %149, %152 : vector<16x512xf32>
    %154 = arith.mulf %153, %153 : vector<16x512xf32>
    %155 = arith.mulf %153, %154 : vector<16x512xf32>
    %cst_65 = arith.constant 4.471500e-02 : f32
    %156 = vector.broadcast %cst_65 : f32 to vector<16x512xf32>
    %157 = arith.mulf %156, %155 : vector<16x512xf32>
    %158 = arith.addf %153, %157 : vector<16x512xf32>
    %cst_66 = arith.constant 0.797884583 : f32
    %159 = vector.broadcast %cst_66 : f32 to vector<16x512xf32>
    %160 = arith.mulf %159, %158 : vector<16x512xf32>
    %161 = math.tanh %160 : vector<16x512xf32>
    %cst_67 = arith.constant 1.000000e+00 : f32
    %162 = vector.broadcast %cst_67 : f32 to vector<16x512xf32>
    %163 = arith.addf %162, %161 : vector<16x512xf32>
    %cst_68 = arith.constant 5.000000e-01 : f32
    %164 = vector.broadcast %cst_68 : f32 to vector<16x512xf32>
    %165 = arith.mulf %164, %163 : vector<16x512xf32>
    %166 = arith.mulf %153, %165 : vector<16x512xf32>
    %167 = arith.truncf %166 : vector<16x512xf32> to vector<16x512xbf16>
    %c0_69 = arith.constant 0 : index
    %c0_70 = arith.constant 0 : index
    %c0_71 = arith.constant 0 : index
    %168 = vector.load %arg13[%c0_69, %c0_70, %c0_71] : memref<1x512x128xbf16, #tpu.memory_space<vmem>>, vector<1x512x128xbf16>
    %169 = vector.shape_cast %168 : vector<1x512x128xbf16> to vector<512x128xbf16>
    %cst_72 = arith.constant dense<0.000000e+00> : vector<16x128xf32>
    %170 = tpu.matmul %167, %169, %cst_72 {dimension_numbers = #tpu.dot_dimension_numbers<[1], [0], [0], [1], [0, 0, 1, 1], [], []>} : vector<16x512xbf16>, vector<512x128xbf16>, vector<16x128xf32> -> vector<16x128xf32>
    %c0_73 = arith.constant 0 : index
    %c0_74 = arith.constant 0 : index
    %c0_75 = arith.constant 0 : index
    %171 = vector.load %arg14[%c0_73, %c0_74, %c0_75] : memref<1x1x128xf32, #tpu.memory_space<vmem>>, vector<1x1x128xf32>
    %172 = vector.shape_cast %171 : vector<1x1x128xf32> to vector<1x128xf32>
    %173 = vector.broadcast %172 : vector<1x128xf32> to vector<16x128xf32>
    %174 = arith.addf %170, %173 : vector<16x128xf32>
    %175 = arith.addf %121, %174 : vector<16x128xf32>
    %c0_76 = arith.constant 0 : index
    %c0_77 = arith.constant 0 : index
    %c0_78 = arith.constant 0 : index
    %176 = vector.load %arg16[%c0_76, %c0_77, %c0_78] : memref<1x16x128xf32, #tpu.memory_space<vmem>>, vector<1x16x128xf32>
    %177 = vector.shape_cast %176 : vector<1x16x128xf32> to vector<16x128xf32>
    %178 = vector.shape_cast %175 : vector<16x128xf32> to vector<1x16x128xf32>
    tpu.vector_store %arg16[%c0_76, %c0_77, %c0_78], %178 {strides = array<i32>} : memref<1x16x128xf32, #tpu.memory_space<vmem>>, vector<1x16x128xf32>,
    %c3_i32 = arith.constant 3 : i32
    %179 = arith.cmpi eq, %arg1, %c3_i32 : i32
    %180 = arith.extui %179 : i1 to i32
    %c0_i32_79 = arith.constant 0 : i32
    %181 = arith.cmpi ne, %180, %c0_i32_79 : i32
    scf.if %181 {
      %c0_80 = arith.constant 0 : index
      %c0_81 = arith.constant 0 : index
      %c0_82 = arith.constant 0 : index
      %182 = vector.load %arg16[%c0_80, %c0_81, %c0_82] : memref<1x16x128xf32, #tpu.memory_space<vmem>>, vector<1x16x128xf32>
      %c0_83 = arith.constant 0 : index
      %c0_84 = arith.constant 0 : index
      %c0_85 = arith.constant 0 : index
      %183 = vector.load %arg15[%c0_83, %c0_84, %c0_85] : memref<1x16x128xf32, #tpu.memory_space<vmem>>, vector<1x16x128xf32>
      tpu.vector_store %arg15[%c0_83, %c0_84, %c0_85], %182 {strides = array<i32>} : memref<1x16x128xf32, #tpu.memory_space<vmem>>, vector<1x16x128xf32>,
    } else {
    }
    return
  }
  func.func @transform_0(%arg0: i32, %arg1: i32) -> (i32, i32, i32) {
    %c0_i32 = arith.constant 0 : i32
    %c0_i32_0 = arith.constant 0 : i32
    %c0_i32_1 = arith.constant 0 : i32
    return %arg0, %c0_i32, %c0_i32_0 : i32, i32, i32
  }
  func.func @transform_1(%arg0: i32, %arg1: i32) -> (i32, i32, i32) {
    %c0_i32 = arith.constant 0 : i32
    %c0_i32_0 = arith.constant 0 : i32
    %c0_i32_1 = arith.constant 0 : i32
    return %arg0, %c0_i32, %c0_i32_0 : i32, i32, i32
  }
  func.func @transform_2(%arg0: i32, %arg1: i32) -> (i32, i32, i32) {
    %c0_i32 = arith.constant 0 : i32
    %c0_i32_0 = arith.constant 0 : i32
    %c0_i32_1 = arith.constant 0 : i32
    return %arg1, %c0_i32, %c0_i32_0 : i32, i32, i32
  }
  func.func @transform_3(%arg0: i32, %arg1: i32) -> (i32, i32, i32) {
    %c0_i32 = arith.constant 0 : i32
    %c0_i32_0 = arith.constant 0 : i32
    %c0_i32_1 = arith.constant 0 : i32
    return %arg1, %c0_i32, %c0_i32_0 : i32, i32, i32
  }
  func.func @transform_4(%arg0: i32, %arg1: i32) -> (i32, i32, i32) {
    %c0_i32 = arith.constant 0 : i32
    %c0_i32_0 = arith.constant 0 : i32
    %c0_i32_1 = arith.constant 0 : i32
    return %arg1, %c0_i32, %c0_i32_0 : i32, i32, i32
  }
  func.func @transform_5(%arg0: i32, %arg1: i32) -> (i32, i32, i32) {
    %c0_i32 = arith.constant 0 : i32
    %c0_i32_0 = arith.constant 0 : i32
    %c0_i32_1 = arith.constant 0 : i32
    return %arg1, %c0_i32, %c0_i32_0 : i32, i32, i32
  }
  func.func @transform_6(%arg0: i32, %arg1: i32) -> (i32, i32, i32) {
    %c0_i32 = arith.constant 0 : i32
    %c0_i32_0 = arith.constant 0 : i32
    %c0_i32_1 = arith.constant 0 : i32
    return %arg1, %c0_i32, %c0_i32_0 : i32, i32, i32
  }
  func.func @transform_7(%arg0: i32, %arg1: i32) -> (i32, i32, i32) {
    %c0_i32 = arith.constant 0 : i32
    %c0_i32_0 = arith.constant 0 : i32
    %c0_i32_1 = arith.constant 0 : i32
    return %arg1, %c0_i32, %c0_i32_0 : i32, i32, i32
  }
  func.func @transform_8(%arg0: i32, %arg1: i32) -> (i32, i32, i32) {
    %c0_i32 = arith.constant 0 : i32
    %c0_i32_0 = arith.constant 0 : i32
    %c0_i32_1 = arith.constant 0 : i32
    return %arg1, %c0_i32, %c0_i32_0 : i32, i32, i32
  }
  func.func @transform_9(%arg0: i32, %arg1: i32) -> (i32, i32, i32) {
    %c0_i32 = arith.constant 0 : i32
    %c0_i32_0 = arith.constant 0 : i32
    %c0_i32_1 = arith.constant 0 : i32
    return %arg1, %c0_i32, %c0_i32_0 : i32, i32, i32
  }
  func.func @transform_10(%arg0: i32, %arg1: i32) -> (i32, i32, i32) {
    %c0_i32 = arith.constant 0 : i32
    %c0_i32_0 = arith.constant 0 : i32
    %c0_i32_1 = arith.constant 0 : i32
    return %arg1, %c0_i32, %c0_i32_0 : i32, i32, i32
  }
  func.func @transform_11(%arg0: i32, %arg1: i32) -> (i32, i32, i32) {
    %c0_i32 = arith.constant 0 : i32
    %c0_i32_0 = arith.constant 0 : i32
    %c0_i32_1 = arith.constant 0 : i32
    return %arg1, %c0_i32, %c0_i32_0 : i32, i32, i32
  }
  func.func @transform_12(%arg0: i32, %arg1: i32) -> (i32, i32, i32) {
    %c0_i32 = arith.constant 0 : i32
    %c0_i32_0 = arith.constant 0 : i32
    %c0_i32_1 = arith.constant 0 : i32
    return %arg1, %c0_i32, %c0_i32_0 : i32, i32, i32
  }
  func.func @transform_13(%arg0: i32, %arg1: i32) -> (i32, i32, i32) {
    %c0_i32 = arith.constant 0 : i32
    %c0_i32_0 = arith.constant 0 : i32
    %c0_i32_1 = arith.constant 0 : i32
    return %arg0, %c0_i32, %c0_i32_0 : i32, i32, i32
  }
}

</mosaic_0001>

<llo_original>
// kernel: transformer_encoder.1
$region0: #{transformer_encoder.1}
  #allocation0 [shape = 'u32[]', space=smem, size = 0x4, offset = 0x4, fixed_abs, tag = 'smem constant byte address 0x4 - core index']
  #allocation1 [shape = 'u32[144,128]{1,0:T(1,128)}', space=vmem, size = 0x12000, scoped, tag = 'internal scratch']
  #allocation2 [shape = 'f32[1,16,128]{2,1,0:T(8,128)}', space=vmem, size = 0x2000, scoped, tag = 'scratch operand']
  %s0 = inlined_call_operand.vmem [shape: f32[2,16,128], index: 0, kind: input, shape index: {}]
  %s1 = inlined_call_operand.vmem [shape: f32[2,16,128], index: 1, kind: input, shape index: {}]
  %s2 = inlined_call_operand.vmem [shape: f32[4,1,128], index: 2, kind: input, shape index: {}]
  %s3 = inlined_call_operand.vmem [shape: f32[4,1,128], index: 3, kind: input, shape index: {}]
  %s4 = inlined_call_operand.vmem [shape: bf16[4,128,384], index: 4, kind: input, shape index: {}]
  %s5 = inlined_call_operand.vmem [shape: bf16[4,128,128], index: 5, kind: input, shape index: {}]
  %s6 = inlined_call_operand.vmem [shape: f32[4,1,128], index: 6, kind: input, shape index: {}]
  %s7 = inlined_call_operand.vmem [shape: f32[4,1,128], index: 7, kind: input, shape index: {}]
  %s8 = inlined_call_operand.vmem [shape: f32[4,1,128], index: 8, kind: input, shape index: {}]
  %s9 = inlined_call_operand.vmem [shape: bf16[4,128,512], index: 9, kind: input, shape index: {}]
  %s10 = inlined_call_operand.vmem [shape: f32[4,1,512], index: 10, kind: input, shape index: {}]
  %s11 = inlined_call_operand.vmem [shape: bf16[4,512,128], index: 11, kind: input, shape index: {}]
  %s12 = inlined_call_operand.vmem [shape: f32[4,1,128], index: 12, kind: input, shape index: {}]
  %s13 = inlined_call_operand.hbm [shape: f32[2,16,128], index: 13, kind: output, shape index: {}]
  %s14 = sld [smem:[#allocation0]]
  $region93: #{transformer_encoder.1} parent=0
    _
  %s16 = ssub.s32 1, %s14
  %s17 = scalar_select 0, %s16, %s14
  $region1: #{transformer_encoder.1} parent=0
    #allocation3 [shape = 'u8[16384]{0}', space=vmem, size = 0x4000, scoped, tag = 'output window, operand 0']
    #allocation4 [shape = 's32[2]{0}', space=sflag, size = 0x8, scoped, tag = 'scoped memory for transformer_encoder.1']
    %18 = vsyncpa [#allocation4], 0
    %s19 = scalar_lea.sflag [#allocation4], 1
    %20 = vsyncpa %s19, 0
    loop: start=0, step=1, limit=10
    $region2: #{transformer_encoder.1} parent=1 // loop_pre_header
      _
    $region3: #{transformer_encoder.1} parent=1 // loop_header
      %s22 = sphi 0, %s26
      %p23 = scmp.ge.s32.totalorder %s22, 10
      %s29 = sphi 0, %s41
      %s30 = sphi 0, %s37
      %s31 = sphi 0, %s29
      %s32 = sphi 0, %s30
      %s33 = sphi 0, %s31
      %s34 = sphi 0, %s32
      %s44 = sphi 0, %s46
      %s47 = sphi 0, %s44
      %s48 = sphi 0, %s47
      %s64 = sphi 0, %s48
      %s70 = sphi 0, %s72
      %s73 = sphi 0, %s70
      %s74 = sphi 0, %s73
      %s90 = sphi 0, %s74
      %s96 = sphi 0, %s98
      %s99 = sphi 0, %s96
      %s100 = sphi 0, %s99
      %s116 = sphi 0, %s100
      %s122 = sphi 0, %s124
      %s125 = sphi 0, %s122
      %s126 = sphi 0, %s125
      %s142 = sphi 0, %s126
      %s148 = sphi 0, %s150
      %s151 = sphi 0, %s148
      %s152 = sphi 0, %s151
      %s168 = sphi 0, %s152
      %s174 = sphi 0, %s176
      %s177 = sphi 0, %s174
      %s178 = sphi 0, %s177
      %s194 = sphi 0, %s178
      %s200 = sphi 0, %s202
      %s203 = sphi 0, %s200
      %s204 = sphi 0, %s203
      %s220 = sphi 0, %s204
      %s226 = sphi 0, %s228
      %s229 = sphi 0, %s226
      %s230 = sphi 0, %s229
      %s246 = sphi 0, %s230
      %s252 = sphi 0, %s254
      %s255 = sphi 0, %s252
      %s256 = sphi 0, %s255
      %s272 = sphi 0, %s256
      %s278 = sphi 0, %s280
      %s281 = sphi 0, %s278
      %s282 = sphi 0, %s281
      %s298 = sphi 0, %s282
      %s304 = sphi 0, %s306
      %s307 = sphi 0, %s304
      %s308 = sphi 0, %s307
      %s324 = sphi 0, %s308
      %s330 = sphi 0, %s332
      %s333 = sphi 0, %s330
      %s334 = sphi 0, %s333
      %s350 = sphi 0, %s334
      %s356 = sphi 0, %s358
      %s359 = sphi 0, %s356
      %s360 = sphi 0, %s359
      %s376 = sphi 0, %s360
      %s382 = sphi 0, %s384
      %s385 = sphi 0, %s382
      %s386 = sphi 0, %s385
      %s402 = sphi 0, %s386
    $region4: #{transformer_encoder.1} parent=1 // loop_header_branch
      %25 = sbr.rel (%p23) target = $region8
    $region5: #{transformer_encoder.1} parent=1 // loop_body
      %s27 = ssub.s32 %s22, 1
      %s28 = ssub.s32 %s22, 2
      %s35 = sadd.s32 1, %s30
      %p36 = scmp.ge.s32.totalorder %s35, 4
      %s37 = scalar_select %p36, 0, %s35
      %s38 = sadd.s32 1, %s29
      %s39 = scalar_select %p36, %s38, %s29
      %p40 = scmp.ge.s32.totalorder %s39, 2
      %s41 = scalar_select %p40, 0, %s39
      %s42 = ssub.s32 %s29, %s41
      %p43 = scmp.eq.s32.totalorder %s42, 0
      %s45 = sadd.s32 %s44, 1
      %s46 = scalar_select %p43, %s44, %s45
      %p49 = pneg %p43
      %p50 = scmp.eq.s32.totalorder %s22, 7
      %p51 = por %p49, %p50
      %p52 = scmp.ne.s32.totalorder %s44, %s47
      %p53 = scmp.eq.s32.totalorder %s22, 0
      %p54 = por %p52, %p53
      %p55 = scmp.ne.s32.totalorder %s44, %s47
      %p56 = scmp.eq.s32.totalorder %s27, 7
      %p57 = por %p55, %p56
      %p58 = scmp.ne.s32.totalorder %s47, %s48
      %p59 = scmp.eq.s32.totalorder %s27, 0
      %p60 = por %p58, %p59
      %p61 = scmp.ne.s32.totalorder %s47, %s48
      %p62 = scmp.eq.s32.totalorder %s28, 7
      %p63 = por %p61, %p62
      %p65 = scmp.ne.s32.totalorder %s48, %s64
      %p66 = scmp.eq.s32.totalorder %s28, 0
      %p67 = por %p65, %p66
      %s68 = ssub.s32 %s29, %s41
      %p69 = scmp.eq.s32.totalorder %s68, 0
      %s71 = sadd.s32 %s70, 1
      %s72 = scalar_select %p69, %s70, %s71
      %p75 = pneg %p69
      %p76 = scmp.eq.s32.totalorder %s22, 7
      %p77 = por %p75, %p76
      %p78 = scmp.ne.s32.totalorder %s70, %s73
      %p79 = scmp.eq.s32.totalorder %s22, 0
      %p80 = por %p78, %p79
      %p81 = scmp.ne.s32.totalorder %s70, %s73
      %p82 = scmp.eq.s32.totalorder %s27, 7
      %p83 = por %p81, %p82
      %p84 = scmp.ne.s32.totalorder %s73, %s74
      %p85 = scmp.eq.s32.totalorder %s27, 0
      %p86 = por %p84, %p85
      %p87 = scmp.ne.s32.totalorder %s73, %s74
      %p88 = scmp.eq.s32.totalorder %s28, 7
      %p89 = por %p87, %p88
      %p91 = scmp.ne.s32.totalorder %s74, %s90
      %p92 = scmp.eq.s32.totalorder %s28, 0
      %p93 = por %p91, %p92
      %s94 = ssub.s32 %s30, %s37
      %p95 = scmp.eq.s32.totalorder %s94, 0
      %s97 = sadd.s32 %s96, 1
      %s98 = scalar_select %p95, %s96, %s97
      %p101 = pneg %p95
      %p102 = scmp.eq.s32.totalorder %s22, 7
      %p103 = por %p101, %p102
      %p104 = scmp.ne.s32.totalorder %s96, %s99
      %p105 = scmp.eq.s32.totalorder %s22, 0
      %p106 = por %p104, %p105
      %p107 = scmp.ne.s32.totalorder %s96, %s99
      %p108 = scmp.eq.s32.totalorder %s27, 7
      %p109 = por %p107, %p108
      %p110 = scmp.ne.s32.totalorder %s99, %s100
      %p111 = scmp.eq.s32.totalorder %s27, 0
      %p112 = por %p110, %p111
      %p113 = scmp.ne.s32.totalorder %s99, %s100
      %p114 = scmp.eq.s32.totalorder %s28, 7
      %p115 = por %p113, %p114
      %p117 = scmp.ne.s32.totalorder %s100, %s116
      %p118 = scmp.eq.s32.totalorder %s28, 0
      %p119 = por %p117, %p118
      %s120 = ssub.s32 %s30, %s37
      %p121 = scmp.eq.s32.totalorder %s120, 0
      %s123 = sadd.s32 %s122, 1
      %s124 = scalar_select %p121, %s122, %s123
      %p127 = pneg %p121
      %p128 = scmp.eq.s32.totalorder %s22, 7
      %p129 = por %p127, %p128
      %p130 = scmp.ne.s32.totalorder %s122, %s125
      %p131 = scmp.eq.s32.totalorder %s22, 0
      %p132 = por %p130, %p131
      %p133 = scmp.ne.s32.totalorder %s122, %s125
      %p134 = scmp.eq.s32.totalorder %s27, 7
      %p135 = por %p133, %p134
      %p136 = scmp.ne.s32.totalorder %s125, %s126
      %p137 = scmp.eq.s32.totalorder %s27, 0
      %p138 = por %p136, %p137
      %p139 = scmp.ne.s32.totalorder %s125, %s126
      %p140 = scmp.eq.s32.totalorder %s28, 7
      %p141 = por %p139, %p140
      %p143 = scmp.ne.s32.totalorder %s126, %s142
      %p144 = scmp.eq.s32.totalorder %s28, 0
      %p145 = por %p143, %p144
      %s146 = ssub.s32 %s30, %s37
      %p147 = scmp.eq.s32.totalorder %s146, 0
      %s149 = sadd.s32 %s148, 1
      %s150 = scalar_select %p147, %s148, %s149
      %p153 = pneg %p147
      %p154 = scmp.eq.s32.totalorder %s22, 7
      %p155 = por %p153, %p154
      %p156 = scmp.ne.s32.totalorder %s148, %s151
      %p157 = scmp.eq.s32.totalorder %s22, 0
      %p158 = por %p156, %p157
      %p159 = scmp.ne.s32.totalorder %s148, %s151
      %p160 = scmp.eq.s32.totalorder %s27, 7
      %p161 = por %p159, %p160
      %p162 = scmp.ne.s32.totalorder %s151, %s152
      %p163 = scmp.eq.s32.totalorder %s27, 0
      %p164 = por %p162, %p163
      %p165 = scmp.ne.s32.totalorder %s151, %s152
      %p166 = scmp.eq.s32.totalorder %s28, 7
      %p167 = por %p165, %p166
      %p169 = scmp.ne.s32.totalorder %s152, %s168
      %p170 = scmp.eq.s32.totalorder %s28, 0
      %p171 = por %p169, %p170
      %s172 = ssub.s32 %s30, %s37
      %p173 = scmp.eq.s32.totalorder %s172, 0
      %s175 = sadd.s32 %s174, 1
      %s176 = scalar_select %p173, %s174, %s175
      %p179 = pneg %p173
      %p180 = scmp.eq.s32.totalorder %s22, 7
      %p181 = por %p179, %p180
      %p182 = scmp.ne.s32.totalorder %s174, %s177
      %p183 = scmp.eq.s32.totalorder %s22, 0
      %p184 = por %p182, %p183
      %p185 = scmp.ne.s32.totalorder %s174, %s177
      %p186 = scmp.eq.s32.totalorder %s27, 7
      %p187 = por %p185, %p186
      %p188 = scmp.ne.s32.totalorder %s177, %s178
      %p189 = scmp.eq.s32.totalorder %s27, 0
      %p190 = por %p188, %p189
      %p191 = scmp.ne.s32.totalorder %s177, %s178
      %p192 = scmp.eq.s32.totalorder %s28, 7
      %p193 = por %p191, %p192
      %p195 = scmp.ne.s32.totalorder %s178, %s194
      %p196 = scmp.eq.s32.totalorder %s28, 0
      %p197 = por %p195, %p196
      %s198 = ssub.s32 %s30, %s37
      %p199 = scmp.eq.s32.totalorder %s198, 0
      %s201 = sadd.s32 %s200, 1
      %s202 = scalar_select %p199, %s200, %s201
      %p205 = pneg %p199
      %p206 = scmp.eq.s32.totalorder %s22, 7
      %p207 = por %p205, %p206
      %p208 = scmp.ne.s32.totalorder %s200, %s203
      %p209 = scmp.eq.s32.totalorder %s22, 0
      %p210 = por %p208, %p209
      %p211 = scmp.ne.s32.totalorder %s200, %s203
      %p212 = scmp.eq.s32.totalorder %s27, 7
      %p213 = por %p211, %p212
      %p214 = scmp.ne.s32.totalorder %s203, %s204
      %p215 = scmp.eq.s32.totalorder %s27, 0
      %p216 = por %p214, %p215
      %p217 = scmp.ne.s32.totalorder %s203, %s204
      %p218 = scmp.eq.s32.totalorder %s28, 7
      %p219 = por %p217, %p218
      %p221 = scmp.ne.s32.totalorder %s204, %s220
      %p222 = scmp.eq.s32.totalorder %s28, 0
      %p223 = por %p221, %p222
      %s224 = ssub.s32 %s30, %s37
      %p225 = scmp.eq.s32.totalorder %s224, 0
      %s227 = sadd.s32 %s226, 1
      %s228 = scalar_select %p225, %s226, %s227
      %p231 = pneg %p225
      %p232 = scmp.eq.s32.totalorder %s22, 7
      %p233 = por %p231, %p232
      %p234 = scmp.ne.s32.totalorder %s226, %s229
      %p235 = scmp.eq.s32.totalorder %s22, 0
      %p236 = por %p234, %p235
      %p237 = scmp.ne.s32.totalorder %s226, %s229
      %p238 = scmp.eq.s32.totalorder %s27, 7
      %p239 = por %p237, %p238
      %p240 = scmp.ne.s32.totalorder %s229, %s230
      %p241 = scmp.eq.s32.totalorder %s27, 0
      %p242 = por %p240, %p241
      %p243 = scmp.ne.s32.totalorder %s229, %s230
      %p244 = scmp.eq.s32.totalorder %s28, 7
      %p245 = por %p243, %p244
      %p247 = scmp.ne.s32.totalorder %s230, %s246
      %p248 = scmp.eq.s32.totalorder %s28, 0
      %p249 = por %p247, %p248
      %s250 = ssub.s32 %s30, %s37
      %p251 = scmp.eq.s32.totalorder %s250, 0
      %s253 = sadd.s32 %s252, 1
      %s254 = scalar_select %p251, %s252, %s253
      %p257 = pneg %p251
      %p258 = scmp.eq.s32.totalorder %s22, 7
      %p259 = por %p257, %p258
      %p260 = scmp.ne.s32.totalorder %s252, %s255
      %p261 = scmp.eq.s32.totalorder %s22, 0
      %p262 = por %p260, %p261
      %p263 = scmp.ne.s32.totalorder %s252, %s255
      %p264 = scmp.eq.s32.totalorder %s27, 7
      %p265 = por %p263, %p264
      %p266 = scmp.ne.s32.totalorder %s255, %s256
      %p267 = scmp.eq.s32.totalorder %s27, 0
      %p268 = por %p266, %p267
      %p269 = scmp.ne.s32.totalorder %s255, %s256
      %p270 = scmp.eq.s32.totalorder %s28, 7
      %p271 = por %p269, %p270
      %p273 = scmp.ne.s32.totalorder %s256, %s272
      %p274 = scmp.eq.s32.totalorder %s28, 0
      %p275 = por %p273, %p274
      %s276 = ssub.s32 %s30, %s37
      %p277 = scmp.eq.s32.totalorder %s276, 0
      %s279 = sadd.s32 %s278, 1
      %s280 = scalar_select %p277, %s278, %s279
      %p283 = pneg %p277
      %p284 = scmp.eq.s32.totalorder %s22, 7
      %p285 = por %p283, %p284
      %p286 = scmp.ne.s32.totalorder %s278, %s281
      %p287 = scmp.eq.s32.totalorder %s22, 0
      %p288 = por %p286, %p287
      %p289 = scmp.ne.s32.totalorder %s278, %s281
      %p290 = scmp.eq.s32.totalorder %s27, 7
      %p291 = por %p289, %p290
      %p292 = scmp.ne.s32.totalorder %s281, %s282
      %p293 = scmp.eq.s32.totalorder %s27, 0
      %p294 = por %p292, %p293
      %p295 = scmp.ne.s32.totalorder %s281, %s282
      %p296 = scmp.eq.s32.totalorder %s28, 7
      %p297 = por %p295, %p296
      %p299 = scmp.ne.s32.totalorder %s282, %s298
      %p300 = scmp.eq.s32.totalorder %s28, 0
      %p301 = por %p299, %p300
      %s302 = ssub.s32 %s30, %s37
      %p303 = scmp.eq.s32.totalorder %s302, 0
      %s305 = sadd.s32 %s304, 1
      %s306 = scalar_select %p303, %s304, %s305
      %p309 = pneg %p303
      %p310 = scmp.eq.s32.totalorder %s22, 7
      %p311 = por %p309, %p310
      %p312 = scmp.ne.s32.totalorder %s304, %s307
      %p313 = scmp.eq.s32.totalorder %s22, 0
      %p314 = por %p312, %p313
      %p315 = scmp.ne.s32.totalorder %s304, %s307
      %p316 = scmp.eq.s32.totalorder %s27, 7
      %p317 = por %p315, %p316
      %p318 = scmp.ne.s32.totalorder %s307, %s308
      %p319 = scmp.eq.s32.totalorder %s27, 0
      %p320 = por %p318, %p319
      %p321 = scmp.ne.s32.totalorder %s307, %s308
      %p322 = scmp.eq.s32.totalorder %s28, 7
      %p323 = por %p321, %p322
      %p325 = scmp.ne.s32.totalorder %s308, %s324
      %p326 = scmp.eq.s32.totalorder %s28, 0
      %p327 = por %p325, %p326
      %s328 = ssub.s32 %s30, %s37
      %p329 = scmp.eq.s32.totalorder %s328, 0
      %s331 = sadd.s32 %s330, 1
      %s332 = scalar_select %p329, %s330, %s331
      %p335 = pneg %p329
      %p336 = scmp.eq.s32.totalorder %s22, 7
      %p337 = por %p335, %p336
      %p338 = scmp.ne.s32.totalorder %s330, %s333
      %p339 = scmp.eq.s32.totalorder %s22, 0
      %p340 = por %p338, %p339
      %p341 = scmp.ne.s32.totalorder %s330, %s333
      %p342 = scmp.eq.s32.totalorder %s27, 7
      %p343 = por %p341, %p342
      %p344 = scmp.ne.s32.totalorder %s333, %s334
      %p345 = scmp.eq.s32.totalorder %s27, 0
      %p346 = por %p344, %p345
      %p347 = scmp.ne.s32.totalorder %s333, %s334
      %p348 = scmp.eq.s32.totalorder %s28, 7
      %p349 = por %p347, %p348
      %p351 = scmp.ne.s32.totalorder %s334, %s350
      %p352 = scmp.eq.s32.totalorder %s28, 0
      %p353 = por %p351, %p352
      %s354 = ssub.s32 %s30, %s37
      %p355 = scmp.eq.s32.totalorder %s354, 0
      %s357 = sadd.s32 %s356, 1
      %s358 = scalar_select %p355, %s356, %s357
      %p361 = pneg %p355
      %p362 = scmp.eq.s32.totalorder %s22, 7
      %p363 = por %p361, %p362
      %p364 = scmp.ne.s32.totalorder %s356, %s359
      %p365 = scmp.eq.s32.totalorder %s22, 0
      %p366 = por %p364, %p365
      %p367 = scmp.ne.s32.totalorder %s356, %s359
      %p368 = scmp.eq.s32.totalorder %s27, 7
      %p369 = por %p367, %p368
      %p370 = scmp.ne.s32.totalorder %s359, %s360
      %p371 = scmp.eq.s32.totalorder %s27, 0
      %p372 = por %p370, %p371
      %p373 = scmp.ne.s32.totalorder %s359, %s360
      %p374 = scmp.eq.s32.totalorder %s28, 7
      %p375 = por %p373, %p374
      %p377 = scmp.ne.s32.totalorder %s360, %s376
      %p378 = scmp.eq.s32.totalorder %s28, 0
      %p379 = por %p377, %p378
      %s380 = ssub.s32 %s29, %s41
      %p381 = scmp.eq.s32.totalorder %s380, 0
      %s383 = sadd.s32 %s382, 1
      %s384 = scalar_select %p381, %s382, %s383
      %p387 = pneg %p381
      %p388 = scmp.eq.s32.totalorder %s22, 7
      %p389 = por %p387, %p388
      %p390 = scmp.ne.s32.totalorder %s382, %s385
      %p391 = scmp.eq.s32.totalorder %s22, 0
      %p392 = por %p390, %p391
      %p393 = scmp.ne.s32.totalorder %s382, %s385
      %p394 = scmp.eq.s32.totalorder %s27, 7
      %p395 = por %p393, %p394
      %p396 = scmp.ne.s32.totalorder %s385, %s386
      %p397 = scmp.eq.s32.totalorder %s27, 0
      %p398 = por %p396, %p397
      %p399 = scmp.ne.s32.totalorder %s385, %s386
      %p400 = scmp.eq.s32.totalorder %s28, 7
      %p401 = por %p399, %p400
      %p403 = scmp.ne.s32.totalorder %s386, %s402
      %p404 = scmp.eq.s32.totalorder %s28, 0
      %p405 = por %p403, %p404
      %p406 = scmp.le.s32.totalorder 1, %s22
      %p407 = scmp.lt.s32.totalorder %s22, 9
      %p408 = pnand %p406, %p407
      %p409 = pneg %p408
      // Predicated region
      $region9: #{transformer_encoder.1} parent=5 // pred_check
        _
      $region10: #{transformer_encoder.1} parent=5 // pred_check_branch
        %411 = sbr.rel (%p408) target = $region12
      $region11: #{transformer_encoder.1} parent=5 // pred_region
        %s412 = ssub.s32 %s22, 1
      $region12: #{transformer_encoder.1} parent=5 // pred_fallthru
        _
      %p413 = scmp.lt.s32.totalorder %s22, 8
      // Predicated region
      $region13: #{transformer_encoder.1} parent=5 // pred_check
        %p414 = pneg %p413
      $region14: #{transformer_encoder.1} parent=5 // pred_check_branch
        %416 = sbr.rel (%p414) target = $region16
      $region15: #{transformer_encoder.1} parent=5 // pred_region
        // Predicated region
        $region17: #{transformer_encoder.1} parent=15 // pred_check
          %p417 = pneg %p54
        $region18: #{transformer_encoder.1} parent=15 // pred_check_branch
          %419 = sbr.rel (%p417) target = $region20
        $region19: #{transformer_encoder.1} parent=15 // pred_region
          %p420 = scmp.lt.s32.totalorder %s29, 1
          %s421 = scalar_select %p420, %s29, 1
          %s422 = smul.addr %s421, 2
          %s423 = smul.addr %s422, 8
          %s424 = scalar_lea.vmem %s0, %s423
        $region20: #{transformer_encoder.1} parent=15 // pred_fallthru
          _
        // Predicated region
        $region21: #{transformer_encoder.1} parent=15 // pred_check
          %p425 = pneg %p80
        $region22: #{transformer_encoder.1} parent=15 // pred_check_branch
          %427 = sbr.rel (%p425) target = $region24
        $region23: #{transformer_encoder.1} parent=15 // pred_region
          %p428 = scmp.lt.s32.totalorder %s29, 1
          %s429 = scalar_select %p428, %s29, 1
          %s430 = smul.addr %s429, 2
          %s431 = smul.addr %s430, 8
          %s432 = scalar_lea.vmem %s1, %s431
        $region24: #{transformer_encoder.1} parent=15 // pred_fallthru
          _
        // Predicated region
        $region25: #{transformer_encoder.1} parent=15 // pred_check
          %p433 = pneg %p106
        $region26: #{transformer_encoder.1} parent=15 // pred_check_branch
          %435 = sbr.rel (%p433) target = $region28
        $region27: #{transformer_encoder.1} parent=15 // pred_region
          %p436 = scmp.lt.s32.totalorder %s30, 3
          %s437 = scalar_select %p436, %s30, 3
          %s438 = scalar_lea.vmem %s2, %s437
        $region28: #{transformer_encoder.1} parent=15 // pred_fallthru
          _
        // Predicated region
        $region29: #{transformer_encoder.1} parent=15 // pred_check
          %p439 = pneg %p132
        $region30: #{transformer_encoder.1} parent=15 // pred_check_branch
          %441 = sbr.rel (%p439) target = $region32
        $region31: #{transformer_encoder.1} parent=15 // pred_region
          %p442 = scmp.lt.s32.totalorder %s30, 3
          %s443 = scalar_select %p442, %s30, 3
          %s444 = scalar_lea.vmem %s3, %s443
        $region32: #{transformer_encoder.1} parent=15 // pred_fallthru
          _
        // Predicated region
        $region33: #{transformer_encoder.1} parent=15 // pred_check
          %p445 = pneg %p158
        $region34: #{transformer_encoder.1} parent=15 // pred_check_branch
          %447 = sbr.rel (%p445) target = $region36
        $region35: #{transformer_encoder.1} parent=15 // pred_region
          %p448 = scmp.lt.s32.totalorder %s30, 3
          %s449 = scalar_select %p448, %s30, 3
          %s450 = smul.addr %s449, 48
          %s451 = smul.addr %s450, 4
          %s452 = scalar_lea.vmem %s4, %s451
        $region36: #{transformer_encoder.1} parent=15 // pred_fallthru
          _
        // Predicated region
        $region37: #{transformer_encoder.1} parent=15 // pred_check
          %p453 = pneg %p184
        $region38: #{transformer_encoder.1} parent=15 // pred_check_branch
          %455 = sbr.rel (%p453) target = $region40
        $region39: #{transformer_encoder.1} parent=15 // pred_region
          %p456 = scmp.lt.s32.totalorder %s30, 3
          %s457 = scalar_select %p456, %s30, 3
          %s458 = smul.addr %s457, 16
          %s459 = smul.addr %s458, 4
          %s460 = scalar_lea.vmem %s5, %s459
        $region40: #{transformer_encoder.1} parent=15 // pred_fallthru
          _
        // Predicated region
        $region41: #{transformer_encoder.1} parent=15 // pred_check
          %p461 = pneg %p210
        $region42: #{transformer_encoder.1} parent=15 // pred_check_branch
          %463 = sbr.rel (%p461) target = $region44
        $region43: #{transformer_encoder.1} parent=15 // pred_region
          %p464 = scmp.lt.s32.totalorder %s30, 3
          %s465 = scalar_select %p464, %s30, 3
          %s466 = scalar_lea.vmem %s6, %s465
        $region44: #{transformer_encoder.1} parent=15 // pred_fallthru
          _
        // Predicated region
        $region45: #{transformer_encoder.1} parent=15 // pred_check
          %p467 = pneg %p236
        $region46: #{transformer_encoder.1} parent=15 // pred_check_branch
          %469 = sbr.rel (%p467) target = $region48
        $region47: #{transformer_encoder.1} parent=15 // pred_region
          %p470 = scmp.lt.s32.totalorder %s30, 3
          %s471 = scalar_select %p470, %s30, 3
          %s472 = scalar_lea.vmem %s7, %s471
        $region48: #{transformer_encoder.1} parent=15 // pred_fallthru
          _
        // Predicated region
        $region49: #{transformer_encoder.1} parent=15 // pred_check
          %p473 = pneg %p262
        $region50: #{transformer_encoder.1} parent=15 // pred_check_branch
          %475 = sbr.rel (%p473) target = $region52
        $region51: #{transformer_encoder.1} parent=15 // pred_region
          %p476 = scmp.lt.s32.totalorder %s30, 3
          %s477 = scalar_select %p476, %s30, 3
          %s478 = scalar_lea.vmem %s8, %s477
        $region52: #{transformer_encoder.1} parent=15 // pred_fallthru
          _
        // Predicated region
        $region53: #{transformer_encoder.1} parent=15 // pred_check
          %p479 = pneg %p288
        $region54: #{transformer_encoder.1} parent=15 // pred_check_branch
          %481 = sbr.rel (%p479) target = $region56
        $region55: #{transformer_encoder.1} parent=15 // pred_region
          %p482 = scmp.lt.s32.totalorder %s30, 3
          %s483 = scalar_select %p482, %s30, 3
          %s484 = smul.addr %s483, 64
          %s485 = smul.addr %s484, 4
          %s486 = scalar_lea.vmem %s9, %s485
        $region56: #{transformer_encoder.1} parent=15 // pred_fallthru
          _
        // Predicated region
        $region57: #{transformer_encoder.1} parent=15 // pred_check
          %p487 = pneg %p314
        $region58: #{transformer_encoder.1} parent=15 // pred_check_branch
          %489 = sbr.rel (%p487) target = $region60
        $region59: #{transformer_encoder.1} parent=15 // pred_region
          %p490 = scmp.lt.s32.totalorder %s30, 3
          %s491 = scalar_select %p490, %s30, 3
          %s492 = smul.addr %s491, 4
          %s493 = scalar_lea.vmem %s10, %s492
        $region60: #{transformer_encoder.1} parent=15 // pred_fallthru
          _
        // Predicated region
        $region61: #{transformer_encoder.1} parent=15 // pred_check
          %p494 = pneg %p340
        $region62: #{transformer_encoder.1} parent=15 // pred_check_branch
          %496 = sbr.rel (%p494) target = $region64
        $region63: #{transformer_encoder.1} parent=15 // pred_region
          %p497 = scmp.lt.s32.totalorder %s30, 3
          %s498 = scalar_select %p497, %s30, 3
          %s499 = smul.addr %s498, 64
          %s500 = smul.addr %s499, 4
          %s501 = scalar_lea.vmem %s11, %s500
        $region64: #{transformer_encoder.1} parent=15 // pred_fallthru
          _
        // Predicated region
        $region65: #{transformer_encoder.1} parent=15 // pred_check
          %p502 = pneg %p366
        $region66: #{transformer_encoder.1} parent=15 // pred_check_branch
          %504 = sbr.rel (%p502) target = $region68
        $region67: #{transformer_encoder.1} parent=15 // pred_region
          %p505 = scmp.lt.s32.totalorder %s30, 3
          %s506 = scalar_select %p505, %s30, 3
          %s507 = scalar_lea.vmem %s12, %s506
        $region68: #{transformer_encoder.1} parent=15 // pred_fallthru
          _
      $region16: #{transformer_encoder.1} parent=5 // pred_fallthru
        _
      %p508 = scmp.le.s32.totalorder 1, %s22
      %p509 = scmp.lt.s32.totalorder %s22, 9
      %p510 = pnand %p508, %p509
      %p511 = pneg %p510
      // Predicated region
      $region69: #{transformer_encoder.1} parent=5 // pred_check
        _
      $region70: #{transformer_encoder.1} parent=5 // pred_check_branch
        %513 = sbr.rel (%p510) target = $region72
      $region71: #{transformer_encoder.1} parent=5 // pred_region
        %s514 = ssub.s32 %s22, 1
        %p515 = scmp.lt.s32.totalorder %s31, 1
        %s516 = scalar_select %p515, %s31, 1
        %s517 = smul.addr %s516, 2
        %s518 = smul.addr %s517, 8
        %s519 = scalar_lea.vmem %s0, %s518
        %p520 = pneg %p60
        %p521 = pneg %p57
        %p522 = scmp.lt.s32.totalorder %s31, 1
        %s523 = scalar_select %p522, %s31, 1
        %s524 = smul.addr %s523, 2
        %s525 = smul.addr %s524, 8
        %s526 = scalar_lea.vmem %s1, %s525
        %p527 = pneg %p86
        %p528 = pneg %p83
        %p529 = scmp.lt.s32.totalorder %s32, 3
        %s530 = scalar_select %p529, %s32, 3
        %s531 = scalar_lea.vmem %s2, %s530
        %p532 = pneg %p112
        %p533 = pneg %p109
        %p534 = scmp.lt.s32.totalorder %s32, 3
        %s535 = scalar_select %p534, %s32, 3
        %s536 = scalar_lea.vmem %s3, %s535
        %p537 = pneg %p138
        %p538 = pneg %p135
        %p539 = scmp.lt.s32.totalorder %s32, 3
        %s540 = scalar_select %p539, %s32, 3
        %s541 = smul.addr %s540, 48
        %s542 = smul.addr %s541, 4
        %s543 = scalar_lea.vmem %s4, %s542
        %p544 = pneg %p164
        %p545 = pneg %p161
        %p546 = scmp.lt.s32.totalorder %s32, 3
        %s547 = scalar_select %p546, %s32, 3
        %s548 = smul.addr %s547, 16
        %s549 = smul.addr %s548, 4
        %s550 = scalar_lea.vmem %s5, %s549
        %p551 = pneg %p190
        %p552 = pneg %p187
        %p553 = scmp.lt.s32.totalorder %s32, 3
        %s554 = scalar_select %p553, %s32, 3
        %s555 = scalar_lea.vmem %s6, %s554
        %p556 = pneg %p216
        %p557 = pneg %p213
        %p558 = scmp.lt.s32.totalorder %s32, 3
        %s559 = scalar_select %p558, %s32, 3
        %s560 = scalar_lea.vmem %s7, %s559
        %p561 = pneg %p242
        %p562 = pneg %p239
        %p563 = scmp.lt.s32.totalorder %s32, 3
        %s564 = scalar_select %p563, %s32, 3
        %s565 = scalar_lea.vmem %s8, %s564
        %p566 = pneg %p268
        %p567 = pneg %p265
        %p568 = scmp.lt.s32.totalorder %s32, 3
        %s569 = scalar_select %p568, %s32, 3
        %s570 = smul.addr %s569, 64
        %s571 = smul.addr %s570, 4
        %s572 = scalar_lea.vmem %s9, %s571
        %p573 = pneg %p294
        %p574 = pneg %p291
        %p575 = scmp.lt.s32.totalorder %s32, 3
        %s576 = scalar_select %p575, %s32, 3
        %s577 = smul.addr %s576, 4
        %s578 = scalar_lea.vmem %s10, %s577
        %p579 = pneg %p320
        %p580 = pneg %p317
        %p581 = scmp.lt.s32.totalorder %s32, 3
        %s582 = scalar_select %p581, %s32, 3
        %s583 = smul.addr %s582, 64
        %s584 = smul.addr %s583, 4
        %s585 = scalar_lea.vmem %s11, %s584
        %p586 = pneg %p346
        %p587 = pneg %p343
        %p588 = scmp.lt.s32.totalorder %s32, 3
        %s589 = scalar_select %p588, %s32, 3
        %s590 = scalar_lea.vmem %s12, %s589
        %p591 = pneg %p372
        %p592 = pneg %p369
        %p593 = pneg %p398
        %p594 = pneg %p395
        %s595 = sand.u32 %s385, 1
        %s596 = scalar_lea.sflag [#allocation4], %s595
        %s597 = sand.u32 %s385, 1
        %s598 = smul.addr %s597, 16
        %s599 = scalar_lea.vmem [#allocation3], %s598
        %p600 = scmp.lt.s32.totalorder %s31, 1
        %s601 = scalar_select %p600, %s31, 1
        %s602 = smul.addr %s601, 2
        %s603 = smul.addr %s602, 8
        %s604 = scalar_lea.vmem %s0, %s603
        %p605 = scmp.lt.s32.totalorder %s31, 1
        %s606 = scalar_select %p605, %s31, 1
        %s607 = smul.addr %s606, 2
        %s608 = smul.addr %s607, 8
        %s609 = scalar_lea.vmem %s1, %s608
        %p610 = scmp.lt.s32.totalorder %s32, 3
        %s611 = scalar_select %p610, %s32, 3
        %s612 = scalar_lea.vmem %s2, %s611
        %p613 = scmp.lt.s32.totalorder %s32, 3
        %s614 = scalar_select %p613, %s32, 3
        %s615 = scalar_lea.vmem %s3, %s614
        %p616 = scmp.lt.s32.totalorder %s32, 3
        %s617 = scalar_select %p616, %s32, 3
        %s618 = smul.addr %s617, 48
        %s619 = smul.addr %s618, 4
        %s620 = scalar_lea.vmem %s4, %s619
        %p621 = scmp.lt.s32.totalorder %s32, 3
        %s622 = scalar_select %p621, %s32, 3
        %s623 = smul.addr %s622, 16
        %s624 = smul.addr %s623, 4
        %s625 = scalar_lea.vmem %s5, %s624
        %p626 = scmp.lt.s32.totalorder %s32, 3
        %s627 = scalar_select %p626, %s32, 3
        %s628 = scalar_lea.vmem %s6, %s627
        %p629 = scmp.lt.s32.totalorder %s32, 3
        %s630 = scalar_select %p629, %s32, 3
        %s631 = scalar_lea.vmem %s7, %s630
        %p632 = scmp.lt.s32.totalorder %s32, 3
        %s633 = scalar_select %p632, %s32, 3
        %s634 = scalar_lea.vmem %s8, %s633
        %p635 = scmp.lt.s32.totalorder %s32, 3
        %s636 = scalar_select %p635, %s32, 3
        %s637 = smul.addr %s636, 64
        %s638 = smul.addr %s637, 4
        %s639 = scalar_lea.vmem %s9, %s638
        %p640 = scmp.lt.s32.totalorder %s32, 3
        %s641 = scalar_select %p640, %s32, 3
        %s642 = smul.addr %s641, 4
        %s643 = scalar_lea.vmem %s10, %s642
        %p644 = scmp.lt.s32.totalorder %s32, 3
        %s645 = scalar_select %p644, %s32, 3
        %s646 = smul.addr %s645, 64
        %s647 = smul.addr %s646, 4
        %s648 = scalar_lea.vmem %s11, %s647
        %p649 = scmp.lt.s32.totalorder %s32, 3
        %s650 = scalar_select %p649, %s32, 3
        %s651 = scalar_lea.vmem %s12, %s650
        %p653 = scmp.eq.s32.totalorder %s32, 0
        // Predicated region
        $region73: #{transformer_encoder.1} parent=71 // pred_check
          %p654 = pneg %p653
        $region74: #{transformer_encoder.1} parent=71 // pred_check_branch
          %656 = sbr.rel (%p654) target = $region76
        $region75: #{transformer_encoder.1} parent=71 // pred_region
          %v657 = vld [vmem:[%s604] sm:$0xff]
          %v658 = vld [vmem:[%s604 + $0x8] sm:$0xff]
          %659 = vst [vmem:[#allocation2] sm:$0xff] %v657
          %660 = vst [vmem:[#allocation2 + $0x8] sm:$0xff] %v658
        $region76: #{transformer_encoder.1} parent=71 // pred_fallthru
          _
        %v661 = vld [vmem:[#allocation2] sm:$0xff]
        %v662 = vld [vmem:[#allocation2 + $0x8] sm:$0xff]
        %v663 = vld [vmem:[%s609] sm:$0xff]
        %v664 = vld [vmem:[%s609 + $0x8] sm:$0xff]
        %v665 = vadd.f32 %v661, %v663
        %v666 = vadd.f32 %v662, %v664
        %v667 = vld [vmem:[%s612] sm:$0x1]
        %v668 = vld [vmem:[%s615] sm:$0x1]
        %669 = vadd.xlane.f32.xlu0 %v665
        %v670 = vpop.xlane.xlu0 %669
        %671 = vadd.xlane.f32.xlu0 %v666
        %v672 = vpop.xlane.xlu0 %671
        %v673 = vrcp.pop 128.0
        %v674 = vmul.f32 %v670, %v673
        %v675 = vmul.f32 %v672, %v673
        %v676 = vsub.f32 %v665, %v674
        %v677 = vsub.f32 %v666, %v675
        %v678 = vmul.f32 %v676, %v676
        %v679 = vmul.f32 %v677, %v677
        %680 = vadd.xlane.f32.xlu0 %v678
        %v681 = vpop.xlane.xlu0 %680
        %682 = vadd.xlane.f32.xlu0 %v679
        %v683 = vpop.xlane.xlu0 %682
        %v684 = vmul.f32 %v681, %v673
        %v685 = vmul.f32 %v683, %v673
        %v686 = vadd.f32 %v684, 1e-05
        %v687 = vadd.f32 %v685, 1e-05
        %v688 = vrsqrt.pop %v686
        %v689 = vrsqrt.pop %v687
        %v690 = vmul.f32 %v676, %v688
        %v691 = vmul.f32 %v677, %v689
        %v693 = vlaneseq
        %v694 = vshrl.u32 %v693, 7
        %v695 = vsub.s32 0, %v694
        %v696 = vrot.slane %v667, %v695
        %v698 = vmul.f32 %v690, %v696
        %v699 = vmul.f32 %v691, %v696
        %v701 = vlaneseq
        %v702 = vshrl.u32 %v701, 7
        %v703 = vsub.s32 0, %v702
        %v704 = vrot.slane %v668, %v703
        %v706 = vadd.f32 %v698, %v704
        %v707 = vadd.f32 %v699, %v704
        %v708 = vpack.c.bf16 %v707, %v706
        %v709 = vld [vmem:[%s620] sm:$0xff]
        %v710 = vld [vmem:[%s620 + $0x8] sm:$0xf]
        %v711 = vld [vmem:[%s620 + $0xc] sm:$0xff]
        %v712 = vld [vmem:[%s620 + $0x14] sm:$0xf]
        %v713 = vld [vmem:[%s620 + $0x18] sm:$0xff]
        %v714 = vld [vmem:[%s620 + $0x20] sm:$0xf]
        %v715 = vld [vmem:[%s620 + $0x24] sm:$0xff]
        %v716 = vld [vmem:[%s620 + $0x2c] sm:$0xf]
        %v717 = vld [vmem:[%s620 + $0x30] sm:$0xff]
        %v718 = vld [vmem:[%s620 + $0x38] sm:$0xf]
        %v719 = vld [vmem:[%s620 + $0x3c] sm:$0xff]
        %v720 = vld [vmem:[%s620 + $0x44] sm:$0xf]
        %v721 = vld [vmem:[%s620 + $0x48] sm:$0xff]
        %v722 = vld [vmem:[%s620 + $0x50] sm:$0xf]
        %v723 = vld [vmem:[%s620 + $0x54] sm:$0xff]
        %v724 = vld [vmem:[%s620 + $0x5c] sm:$0xf]
        %v725 = vld [vmem:[%s620 + $0x60] sm:$0xff]
        %v726 = vld [vmem:[%s620 + $0x68] sm:$0xf]
        %v727 = vld [vmem:[%s620 + $0x6c] sm:$0xff]
        %v728 = vld [vmem:[%s620 + $0x74] sm:$0xf]
        %v729 = vld [vmem:[%s620 + $0x78] sm:$0xff]
        %v730 = vld [vmem:[%s620 + $0x80] sm:$0xf]
        %v731 = vld [vmem:[%s620 + $0x84] sm:$0xff]
        %v732 = vld [vmem:[%s620 + $0x8c] sm:$0xf]
        %v733 = vld [vmem:[%s620 + $0x90] sm:$0xff]
        %v734 = vld [vmem:[%s620 + $0x98] sm:$0xf]
        %v735 = vld [vmem:[%s620 + $0x9c] sm:$0xff]
        %v736 = vld [vmem:[%s620 + $0xa4] sm:$0xf]
        %v737 = vld [vmem:[%s620 + $0xa8] sm:$0xff]
        %v738 = vld [vmem:[%s620 + $0xb0] sm:$0xf]
        %v739 = vld [vmem:[%s620 + $0xb4] sm:$0xff]
        %v740 = vld [vmem:[%s620 + $0xbc] sm:$0xf]
        %v773 = vunpack.c.l.b16 %v709
        %v774 = vunpack.c.h.b16 %v709
        %v775 = vunpack.c.l.b16 %v710
        %v776 = vunpack.c.l.b16 %v711
        %v777 = vunpack.c.h.b16 %v711
        %v778 = vunpack.c.l.b16 %v712
        %v779 = vunpack.c.l.b16 %v713
        %v780 = vunpack.c.h.b16 %v713
        %v781 = vunpack.c.l.b16 %v714
        %v782 = vunpack.c.l.b16 %v715
        %v783 = vunpack.c.h.b16 %v715
        %v784 = vunpack.c.l.b16 %v716
        %v785 = vunpack.c.l.b16 %v717
        %v786 = vunpack.c.h.b16 %v717
        %v787 = vunpack.c.l.b16 %v718
        %v788 = vunpack.c.l.b16 %v719
        %v789 = vunpack.c.h.b16 %v719
        %v790 = vunpack.c.l.b16 %v720
        %v791 = vunpack.c.l.b16 %v721
        %v792 = vunpack.c.h.b16 %v721
        %v793 = vunpack.c.l.b16 %v722
        %v794 = vunpack.c.l.b16 %v723
        %v795 = vunpack.c.h.b16 %v723
        %v796 = vunpack.c.l.b16 %v724
        %v797 = vunpack.c.l.b16 %v725
        %v798 = vunpack.c.h.b16 %v725
        %v799 = vunpack.c.l.b16 %v726
        %v800 = vunpack.c.l.b16 %v727
        %v801 = vunpack.c.h.b16 %v727
        %v802 = vunpack.c.l.b16 %v728
        %v803 = vunpack.c.l.b16 %v729
        %v804 = vunpack.c.h.b16 %v729
        %v805 = vunpack.c.l.b16 %v730
        %v806 = vunpack.c.l.b16 %v731
        %v807 = vunpack.c.h.b16 %v731
        %v808 = vunpack.c.l.b16 %v732
        %v809 = vunpack.c.l.b16 %v733
        %v810 = vunpack.c.h.b16 %v733
        %v811 = vunpack.c.l.b16 %v734
        %v812 = vunpack.c.l.b16 %v735
        %v813 = vunpack.c.h.b16 %v735
        %v814 = vunpack.c.l.b16 %v736
        %v815 = vunpack.c.l.b16 %v737
        %v816 = vunpack.c.h.b16 %v737
        %v817 = vunpack.c.l.b16 %v738
        %v818 = vunpack.c.l.b16 %v739
        %v819 = vunpack.c.h.b16 %v739
        %v820 = vunpack.c.l.b16 %v740
        %v821 = vpack.c.b16 %v776, %v773
        %v822 = vpack.c.b16 %v777, %v774
        %v823 = vpack.c.b16 %v778, %v775
        %v824 = vpack.c.b16 %v782, %v779
        %v825 = vpack.c.b16 %v783, %v780
        %v826 = vpack.c.b16 %v784, %v781
        %v827 = vpack.c.b16 %v788, %v785
        %v828 = vpack.c.b16 %v789, %v786
        %v829 = vpack.c.b16 %v790, %v787
        %v830 = vpack.c.b16 %v794, %v791
        %v831 = vpack.c.b16 %v795, %v792
        %v832 = vpack.c.b16 %v796, %v793
        %v833 = vpack.c.b16 %v800, %v797
        %v834 = vpack.c.b16 %v801, %v798
        %v835 = vpack.c.b16 %v802, %v799
        %v836 = vpack.c.b16 %v806, %v803
        %v837 = vpack.c.b16 %v807, %v804
        %v838 = vpack.c.b16 %v808, %v805
        %v839 = vpack.c.b16 %v812, %v809
        %v840 = vpack.c.b16 %v813, %v810
        %v841 = vpack.c.b16 %v814, %v811
        %v842 = vpack.c.b16 %v818, %v815
        %v843 = vpack.c.b16 %v819, %v816
        %v844 = vpack.c.b16 %v820, %v817
        %869 = vmatprep.subr.bf16.mxu0 %v843
        %870 = vmatpush1.bf16.msra.mxu0 %v842
        %871 = vmatprep.subr.bf16.mxu0 %v840
        %872 = vmatpush1.bf16.msra.mxu0 %v839
        %873 = vmatprep.subr.bf16.mxu0 %v837
        %874 = vmatpush1.bf16.msra.mxu0 %v836
        %875 = vmatprep.subr.bf16.mxu0 %v834
        %876 = vmatpush1.bf16.msra.mxu0 %v833
        %877 = vmatprep.subr.bf16.mxu0 %v831
        %878 = vmatpush1.bf16.msra.mxu0 %v830
        %879 = vmatprep.subr.bf16.mxu0 %v828
        %880 = vmatpush1.bf16.msra.mxu0 %v827
        %881 = vmatprep.subr.bf16.mxu0 %v825
        %882 = vmatpush1.bf16.msra.mxu0 %v824
        %883 = vmatprep.subr.bf16.mxu0 %v822
        %884 = vmatpush1.bf16.msra.mxu0 %v821
        %885 = vmatprep.subr.bf16.mxu0 0
        %886 = vmatpush2.bf16.msra.mxu0 0
        %887 = vmatprep.subr.bf16.mxu0 0
        %888 = vmatpush2.bf16.msra.mxu0 0
        %889 = vmatprep.subr.bf16.mxu0 0
        %890 = vmatpush2.bf16.msra.mxu0 0
        %891 = vmatprep.subr.bf16.mxu0 0
        %892 = vmatpush2.bf16.msra.mxu0 0
        %893 = vmatprep.subr.bf16.mxu0 0
        %894 = vmatpush2.bf16.msra.mxu0 0
        %895 = vmatprep.subr.bf16.mxu0 0
        %896 = vmatpush2.bf16.msra.mxu0 0
        %897 = vmatprep.subr.bf16.mxu0 0
        %898 = vmatpush2.bf16.msra.mxu0 0
        %899 = vmatprep.subr.bf16.mxu0 0
        %900 = vmatpush2.bf16.msra.mxu0 0
        %901 = vmatprep.mubr.bf16.mxu0 0
        %902 = vmatmul.mubr.bf16.gmra.mxu0 %v708
        %v903 = vpop.f32.mrf.mxu0
        %v904 = vadd.f32 0.0, %v903
        %v905 = vpop.f32.mrf.mxu0
        %v906 = vadd.f32 0.0, %v905
        %v907 = vpop.f32.mrf.mxu0
        %v908 = vadd.f32 0.0, %v907
        %v909 = vpop.f32.mrf.mxu0
        %v910 = vadd.f32 0.0, %v909
        %911 = vdwg.mxu0
        %912 = vmatprep.subr.bf16.mxu0 0
        %913 = vmatpush1.bf16.msra.mxu0 %v844
        %914 = vmatprep.subr.bf16.mxu0 0
        %915 = vmatpush1.bf16.msra.mxu0 %v841
        %916 = vmatprep.subr.bf16.mxu0 0
        %917 = vmatpush1.bf16.msra.mxu0 %v838
        %918 = vmatprep.subr.bf16.mxu0 0
        %919 = vmatpush1.bf16.msra.mxu0 %v835
        %920 = vmatprep.subr.bf16.mxu0 0
        %921 = vmatpush1.bf16.msra.mxu0 %v832
        %922 = vmatprep.subr.bf16.mxu0 0
        %923 = vmatpush1.bf16.msra.mxu0 %v829
        %924 = vmatprep.subr.bf16.mxu0 0
        %925 = vmatpush1.bf16.msra.mxu0 %v826
        %926 = vmatprep.subr.bf16.mxu0 0
        %927 = vmatpush1.bf16.msra.mxu0 %v823
        %928 = vmatprep.subr.bf16.mxu0 0
        %929 = vmatpush2.bf16.msra.mxu0 0
        %930 = vmatprep.subr.bf16.mxu0 0
        %931 = vmatpush2.bf16.msra.mxu0 0
        %932 = vmatprep.subr.bf16.mxu0 0
        %933 = vmatpush2.bf16.msra.mxu0 0
        %934 = vmatprep.subr.bf16.mxu0 0
        %935 = vmatpush2.bf16.msra.mxu0 0
        %936 = vmatprep.subr.bf16.mxu0 0
        %937 = vmatpush2.bf16.msra.mxu0 0
        %938 = vmatprep.subr.bf16.mxu0 0
        %939 = vmatpush2.bf16.msra.mxu0 0
        %940 = vmatprep.subr.bf16.mxu0 0
        %941 = vmatpush2.bf16.msra.mxu0 0
        %942 = vmatprep.subr.bf16.mxu0 0
        %943 = vmatpush2.bf16.msra.mxu0 0
        %944 = vmatprep.mubr.bf16.mxu0 0
        %945 = vmatmul.mubr.bf16.gmra.mxu0 %v708
        %v946 = vpop.f32.mrf.mxu0
        %v947 = vadd.f32 0.0, %v946
        %v948 = vpop.f32.mrf.mxu0
        %v949 = vpop.f32.mrf.mxu0
        %v950 = vadd.f32 0.0, %v949
        %v951 = vpop.f32.mrf.mxu0
        %952 = vdwg.mxu0
        %vm953 = vcmask 261120
        %v955 = vsel %vm953, %v904, 0
        %v958 = vsel %vm953, %v908, 0
        %v961 = vsel %vm953, %v906, 0
        %v964 = vsel %vm953, %v910, 0
        %966 = vmatprep.subr.mxu0 0.0
        %967 = vmatpush1.xpose.msra.mxu0 0.0
        %968 = vmatprep.subr.mxu0 0.0
        %969 = vmatpush1.xpose.msra.mxu0 0.0
        %970 = vmatprep.subr.mxu0 0.0
        %971 = vmatpush1.xpose.msra.mxu0 0.0
        %972 = vmatprep.subr.mxu0 0.0
        %973 = vmatpush1.xpose.msra.mxu0 0.0
        %974 = vmatprep.subr.mxu0 0.0
        %975 = vmatpush1.xpose.msra.mxu0 0.0
        %976 = vmatprep.subr.mxu0 0.0
        %977 = vmatpush1.xpose.msra.mxu0 0.0
        %978 = vmatprep.subr.mxu0 0.0
        %979 = vmatpush1.xpose.msra.mxu0 0.0
        %980 = vmatprep.subr.mxu0 0.0
        %981 = vmatpush1.xpose.msra.mxu0 0.0
        %982 = vmatprep.subr.mxu0 0.0
        %983 = vmatpush1.xpose.msra.mxu0 0.0
        %984 = vmatprep.subr.mxu0 0.0
        %985 = vmatpush1.xpose.msra.mxu0 0.0
        %986 = vmatprep.subr.mxu0 0.0
        %987 = vmatpush1.xpose.msra.mxu0 0.0
        %988 = vmatprep.subr.mxu0 0.0
        %989 = vmatpush1.xpose.msra.mxu0 0.0
        %990 = vmatprep.subr.mxu0 0.0
        %991 = vmatpush1.xpose.msra.mxu0 0.0
        %992 = vmatprep.subr.mxu0 0.0
        %993 = vmatpush1.xpose.msra.mxu0 0.0
        %994 = vmatprep.subr.mxu0 0.0
        %995 = vmatpush1.xpose.msra.mxu0 %v964
        %996 = vmatprep.subr.mxu0 0.0
        %997 = vmatpush1.xpose.msra.mxu0 %v961
        %998 = vmatprep.subr.mxu0 0.0
        %999 = vmatpush2.xpose.msra.mxu0 0.0
        %1000 = vmatprep.subr.mxu0 0.0
        %1001 = vmatpush2.xpose.msra.mxu0 0.0
        %1002 = vmatprep.subr.mxu0 0.0
        %1003 = vmatpush2.xpose.msra.mxu0 0.0
        %1004 = vmatprep.subr.mxu0 0.0
        %1005 = vmatpush2.xpose.msra.mxu0 0.0
        %1006 = vmatprep.subr.mxu0 0.0
        %1007 = vmatpush2.xpose.msra.mxu0 0.0
        %1008 = vmatprep.subr.mxu0 0.0
        %1009 = vmatpush2.xpose.msra.mxu0 0.0
        %1010 = vmatprep.subr.mxu0 0.0
        %1011 = vmatpush2.xpose.msra.mxu0 0.0
        %1012 = vmatprep.subr.mxu0 0.0
        %1013 = vmatpush2.xpose.msra.mxu0 0.0
        %1014 = vmatprep.subr.mxu0 0.0
        %1015 = vmatpush2.xpose.msra.mxu0 0.0
        %1016 = vmatprep.subr.mxu0 0.0
        %1017 = vmatpush2.xpose.msra.mxu0 0.0
        %1018 = vmatprep.subr.mxu0 0.0
        %1019 = vmatpush2.xpose.msra.mxu0 0.0
        %1020 = vmatprep.subr.mxu0 0.0
        %1021 = vmatpush2.xpose.msra.mxu0 0.0
        %1022 = vmatprep.subr.mxu0 0.0
        %1023 = vmatpush2.xpose.msra.mxu0 0.0
        %1024 = vmatprep.subr.mxu0 0.0
        %1025 = vmatpush2.xpose.msra.mxu0 0.0
        %1026 = vmatprep.subr.mxu0 0.0
        %1027 = vmatpush2.xpose.msra.mxu0 0.0
        %1028 = vmatprep.subr.mxu0 0.0
        %1029 = vmatpush2.xpose.msra.mxu0 0.0
        %1030 = vmatprep.mubr.f32.mxu0 0.0
        %1031 = vmatmul.mubr.f32.gmra.mxu0 %v955
        %v1032 = vpop.f32.mrf.mxu0
        %v1033 = vadd.f32 0.0, %v1032
        %v1034 = vpop.f32.mrf.mxu0
        %1035 = vmatprep.mubr.f32.mxu0 0.0
        %1036 = vmatmul.mubr.f32.gmra.mxu0 %v958
        %v1037 = vpop.f32.mrf.mxu0
        %v1038 = vadd.f32 0.0, %v1037
        %v1039 = vpop.f32.mrf.mxu0
        %1040 = vdwg.mxu0
        %v1041 = vmul.f32 %v1033, 0.17677669
        %v1042 = vmul.f32 %v1038, 0.17677669
        %vm1043 = vcmask 130048
        %v1044 = vsel %vm1043, %v1041, -inf
        %1045 = vmax.xlane.f32.xlu0 %v1044
        %v1046 = vpop.xlane.xlu0 %1045
        %v1047 = vsel %vm1043, %v1042, -inf
        %1048 = vmax.xlane.f32.xlu0 %v1047
        %v1049 = vpop.xlane.xlu0 %1048
        %v1050 = vsub.f32 %v1041, %v1046
        %v1051 = vsub.f32 %v1042, %v1049
        %v1052 = vmul.f32 %v1050, 1.442695
        %v1053 = vpow.pop %v1052
        %v1054 = vmul.f32 %v1051, 1.442695
        %v1055 = vpow.pop %v1054
        %v1056 = vsel %vm1043, %v1053, 0.0
        %1057 = vadd.xlane.f32.xlu0 %v1056
        %v1058 = vpop.xlane.xlu0 %1057
        %v1059 = vsel %vm1043, %v1055, 0.0
        %1060 = vadd.xlane.f32.xlu0 %v1059
        %v1061 = vpop.xlane.xlu0 %1060
        %v1062 = vrcp.pop %v1058
        %v1063 = vrcp.pop %v1061
        %v1064 = vmul.f32 %v1053, %v1062
        %v1065 = vmul.f32 %v1055, %v1063
        %v1066 = vpack.c.bf16 %v1065, %v1064
        %v1067 = vpack.c.bf16 %v950, %v947
        %v1069 = vsel %vm1043, %v1066, 0
        %1071 = vmatprep.subr.bf16.mxu0 0
        %1072 = vmatpush1.bf16.msra.mxu0 0
        %1073 = vmatprep.subr.bf16.mxu0 0
        %1074 = vmatpush1.bf16.msra.mxu0 0
        %1075 = vmatprep.subr.bf16.mxu0 0
        %1076 = vmatpush1.bf16.msra.mxu0 0
        %1077 = vmatprep.subr.bf16.mxu0 0
        %1078 = vmatpush1.bf16.msra.mxu0 0
        %1079 = vmatprep.subr.bf16.mxu0 0
        %1080 = vmatpush1.bf16.msra.mxu0 0
        %1081 = vmatprep.subr.bf16.mxu0 0
        %1082 = vmatpush1.bf16.msra.mxu0 0
        %1083 = vmatprep.subr.bf16.mxu0 0
        %1084 = vmatpush1.bf16.msra.mxu0 0
        %1085 = vmatprep.subr.bf16.mxu0 0
        %1086 = vmatpush1.bf16.msra.mxu0 %v1067
        %1087 = vmatprep.subr.bf16.mxu0 0
        %1088 = vmatpush2.bf16.msra.mxu0 0
        %1089 = vmatprep.subr.bf16.mxu0 0
        %1090 = vmatpush2.bf16.msra.mxu0 0
        %1091 = vmatprep.subr.bf16.mxu0 0
        %1092 = vmatpush2.bf16.msra.mxu0 0
        %1093 = vmatprep.subr.bf16.mxu0 0
        %1094 = vmatpush2.bf16.msra.mxu0 0
        %1095 = vmatprep.subr.bf16.mxu0 0
        %1096 = vmatpush2.bf16.msra.mxu0 0
        %1097 = vmatprep.subr.bf16.mxu0 0
        %1098 = vmatpush2.bf16.msra.mxu0 0
        %1099 = vmatprep.subr.bf16.mxu0 0
        %1100 = vmatpush2.bf16.msra.mxu0 0
        %1101 = vmatprep.subr.bf16.mxu0 0
        %1102 = vmatpush2.bf16.msra.mxu0 0
        %1103 = vmatprep.mubr.bf16.mxu0 0
        %1104 = vmatmul.mubr.bf16.gmra.mxu0 %v1069
        %v1105 = vpop.f32.mrf.mxu0
        %v1106 = vadd.f32 0.0, %v1105
        %v1107 = vpop.f32.mrf.mxu0
        %v1108 = vpop.f32.mrf.mxu0
        %v1109 = vadd.f32 0.0, %v1108
        %v1110 = vpop.f32.mrf.mxu0
        %1111 = vdwg.mxu0
        %1112 = vrot.lane.b32.xlu0 %v904, 96
        %v1113 = vpop.permute.xlu0 %1112
        %1114 = vrot.lane.b32.xlu0 %v908, 96
        %v1115 = vpop.permute.xlu0 %1114
        %1116 = vrot.lane.b32.xlu0 %v906, 96
        %v1117 = vpop.permute.xlu0 %1116
        %1118 = vrot.lane.b32.xlu0 %v910, 96
        %v1119 = vpop.permute.xlu0 %1118
        %v1120 = vsel %vm953, %v1113, 0
        %v1122 = vsel %vm953, %v1115, 0
        %v1124 = vsel %vm953, %v1117, 0
        %v1126 = vsel %vm953, %v1119, 0
        %1128 = vmatprep.subr.mxu0 0.0
        %1129 = vmatpush1.xpose.msra.mxu0 0.0
        %1130 = vmatprep.subr.mxu0 0.0
        %1131 = vmatpush1.xpose.msra.mxu0 0.0
        %1132 = vmatprep.subr.mxu0 0.0
        %1133 = vmatpush1.xpose.msra.mxu0 0.0
        %1134 = vmatprep.subr.mxu0 0.0
        %1135 = vmatpush1.xpose.msra.mxu0 0.0
        %1136 = vmatprep.subr.mxu0 0.0
        %1137 = vmatpush1.xpose.msra.mxu0 0.0
        %1138 = vmatprep.subr.mxu0 0.0
        %1139 = vmatpush1.xpose.msra.mxu0 0.0
        %1140 = vmatprep.subr.mxu0 0.0
        %1141 = vmatpush1.xpose.msra.mxu0 0.0
        %1142 = vmatprep.subr.mxu0 0.0
        %1143 = vmatpush1.xpose.msra.mxu0 0.0
        %1144 = vmatprep.subr.mxu0 0.0
        %1145 = vmatpush1.xpose.msra.mxu0 0.0
        %1146 = vmatprep.subr.mxu0 0.0
        %1147 = vmatpush1.xpose.msra.mxu0 0.0
        %1148 = vmatprep.subr.mxu0 0.0
        %1149 = vmatpush1.xpose.msra.mxu0 0.0
        %1150 = vmatprep.subr.mxu0 0.0
        %1151 = vmatpush1.xpose.msra.mxu0 0.0
        %1152 = vmatprep.subr.mxu0 0.0
        %1153 = vmatpush1.xpose.msra.mxu0 0.0
        %1154 = vmatprep.subr.mxu0 0.0
        %1155 = vmatpush1.xpose.msra.mxu0 0.0
        %1156 = vmatprep.subr.mxu0 0.0
        %1157 = vmatpush1.xpose.msra.mxu0 %v1126
        %1158 = vmatprep.subr.mxu0 0.0
        %1159 = vmatpush1.xpose.msra.mxu0 %v1124
        %1160 = vmatprep.subr.mxu0 0.0
        %1161 = vmatpush2.xpose.msra.mxu0 0.0
        %1162 = vmatprep.subr.mxu0 0.0
        %1163 = vmatpush2.xpose.msra.mxu0 0.0
        %1164 = vmatprep.subr.mxu0 0.0
        %1165 = vmatpush2.xpose.msra.mxu0 0.0
        %1166 = vmatprep.subr.mxu0 0.0
        %1167 = vmatpush2.xpose.msra.mxu0 0.0
        %1168 = vmatprep.subr.mxu0 0.0
        %1169 = vmatpush2.xpose.msra.mxu0 0.0
        %1170 = vmatprep.subr.mxu0 0.0
        %1171 = vmatpush2.xpose.msra.mxu0 0.0
        %1172 = vmatprep.subr.mxu0 0.0
        %1173 = vmatpush2.xpose.msra.mxu0 0.0
        %1174 = vmatprep.subr.mxu0 0.0
        %1175 = vmatpush2.xpose.msra.mxu0 0.0
        %1176 = vmatprep.subr.mxu0 0.0
        %1177 = vmatpush2.xpose.msra.mxu0 0.0
        %1178 = vmatprep.subr.mxu0 0.0
        %1179 = vmatpush2.xpose.msra.mxu0 0.0
        %1180 = vmatprep.subr.mxu0 0.0
        %1181 = vmatpush2.xpose.msra.mxu0 0.0
        %1182 = vmatprep.subr.mxu0 0.0
        %1183 = vmatpush2.xpose.msra.mxu0 0.0
        %1184 = vmatprep.subr.mxu0 0.0
        %1185 = vmatpush2.xpose.msra.mxu0 0.0
        %1186 = vmatprep.subr.mxu0 0.0
        %1187 = vmatpush2.xpose.msra.mxu0 0.0
        %1188 = vmatprep.subr.mxu0 0.0
        %1189 = vmatpush2.xpose.msra.mxu0 0.0
        %1190 = vmatprep.subr.mxu0 0.0
        %1191 = vmatpush2.xpose.msra.mxu0 0.0
        %1192 = vmatprep.mubr.f32.mxu0 0.0
        %1193 = vmatmul.mubr.f32.gmra.mxu0 %v1120
        %v1194 = vpop.f32.mrf.mxu0
        %v1195 = vadd.f32 0.0, %v1194
        %v1196 = vpop.f32.mrf.mxu0
        %1197 = vmatprep.mubr.f32.mxu0 0.0
        %1198 = vmatmul.mubr.f32.gmra.mxu0 %v1122
        %v1199 = vpop.f32.mrf.mxu0
        %v1200 = vadd.f32 0.0, %v1199
        %v1201 = vpop.f32.mrf.mxu0
        %1202 = vdwg.mxu0
        %v1203 = vmul.f32 %v1195, 0.17677669
        %v1204 = vmul.f32 %v1200, 0.17677669
        %v1205 = vsel %vm1043, %v1203, -inf
        %1206 = vmax.xlane.f32.xlu0 %v1205
        %v1207 = vpop.xlane.xlu0 %1206
        %v1208 = vsel %vm1043, %v1204, -inf
        %1209 = vmax.xlane.f32.xlu0 %v1208
        %v1210 = vpop.xlane.xlu0 %1209
        %v1211 = vsub.f32 %v1203, %v1207
        %v1212 = vsub.f32 %v1204, %v1210
        %v1213 = vmul.f32 %v1211, 1.442695
        %v1214 = vpow.pop %v1213
        %v1215 = vmul.f32 %v1212, 1.442695
        %v1216 = vpow.pop %v1215
        %v1217 = vsel %vm1043, %v1214, 0.0
        %1218 = vadd.xlane.f32.xlu0 %v1217
        %v1219 = vpop.xlane.xlu0 %1218
        %v1220 = vsel %vm1043, %v1216, 0.0
        %1221 = vadd.xlane.f32.xlu0 %v1220
        %v1222 = vpop.xlane.xlu0 %1221
        %v1223 = vrcp.pop %v1219
        %v1224 = vrcp.pop %v1222
        %v1225 = vmul.f32 %v1214, %v1223
        %v1226 = vmul.f32 %v1216, %v1224
        %v1227 = vpack.c.bf16 %v1226, %v1225
        %1229 = vrot.lane.b32.xlu0 %v1067, 96
        %v1230 = vpop.permute.xlu0 %1229
        %v1233 = vsel %vm1043, %v1227, 0
        %1235 = vmatprep.subr.bf16.mxu0 0
        %1236 = vmatpush1.bf16.msra.mxu0 0
        %1237 = vmatprep.subr.bf16.mxu0 0
        %1238 = vmatpush1.bf16.msra.mxu0 0
        %1239 = vmatprep.subr.bf16.mxu0 0
        %1240 = vmatpush1.bf16.msra.mxu0 0
        %1241 = vmatprep.subr.bf16.mxu0 0
        %1242 = vmatpush1.bf16.msra.mxu0 0
        %1243 = vmatprep.subr.bf16.mxu0 0
        %1244 = vmatpush1.bf16.msra.mxu0 0
        %1245 = vmatprep.subr.bf16.mxu0 0
        %1246 = vmatpush1.bf16.msra.mxu0 0
        %1247 = vmatprep.subr.bf16.mxu0 0
        %1248 = vmatpush1.bf16.msra.mxu0 0
        %1249 = vmatprep.subr.bf16.mxu0 0
        %1250 = vmatpush1.bf16.msra.mxu0 %v1230
        %1251 = vmatprep.subr.bf16.mxu0 0
        %1252 = vmatpush2.bf16.msra.mxu0 0
        %1253 = vmatprep.subr.bf16.mxu0 0
        %1254 = vmatpush2.bf16.msra.mxu0 0
        %1255 = vmatprep.subr.bf16.mxu0 0
        %1256 = vmatpush2.bf16.msra.mxu0 0
        %1257 = vmatprep.subr.bf16.mxu0 0
        %1258 = vmatpush2.bf16.msra.mxu0 0
        %1259 = vmatprep.subr.bf16.mxu0 0
        %1260 = vmatpush2.bf16.msra.mxu0 0
        %1261 = vmatprep.subr.bf16.mxu0 0
        %1262 = vmatpush2.bf16.msra.mxu0 0
        %1263 = vmatprep.subr.bf16.mxu0 0
        %1264 = vmatpush2.bf16.msra.mxu0 0
        %1265 = vmatprep.subr.bf16.mxu0 0
        %1266 = vmatpush2.bf16.msra.mxu0 0
        %1267 = vmatprep.mubr.bf16.mxu0 0
        %1268 = vmatmul.mubr.bf16.gmra.mxu0 %v1233
        %v1269 = vpop.f32.mrf.mxu0
        %v1270 = vadd.f32 0.0, %v1269
        %v1271 = vpop.f32.mrf.mxu0
        %v1272 = vpop.f32.mrf.mxu0
        %v1273 = vadd.f32 0.0, %v1272
        %v1274 = vpop.f32.mrf.mxu0
        %1275 = vdwg.mxu0
        %1276 = vrot.lane.b32.xlu0 %v904, 64
        %v1277 = vpop.permute.xlu0 %1276
        %1278 = vrot.lane.b32.xlu0 %v908, 64
        %v1279 = vpop.permute.xlu0 %1278
        %1280 = vrot.lane.b32.xlu0 %v906, 64
        %v1281 = vpop.permute.xlu0 %1280
        %1282 = vrot.lane.b32.xlu0 %v910, 64
        %v1283 = vpop.permute.xlu0 %1282
        %v1284 = vsel %vm953, %v1277, 0
        %v1286 = vsel %vm953, %v1279, 0
        %v1288 = vsel %vm953, %v1281, 0
        %v1290 = vsel %vm953, %v1283, 0
        %1292 = vmatprep.subr.mxu0 0.0
        %1293 = vmatpush1.xpose.msra.mxu0 0.0
        %1294 = vmatprep.subr.mxu0 0.0
        %1295 = vmatpush1.xpose.msra.mxu0 0.0
        %1296 = vmatprep.subr.mxu0 0.0
        %1297 = vmatpush1.xpose.msra.mxu0 0.0
        %1298 = vmatprep.subr.mxu0 0.0
        %1299 = vmatpush1.xpose.msra.mxu0 0.0
        %1300 = vmatprep.subr.mxu0 0.0
        %1301 = vmatpush1.xpose.msra.mxu0 0.0
        %1302 = vmatprep.subr.mxu0 0.0
        %1303 = vmatpush1.xpose.msra.mxu0 0.0
        %1304 = vmatprep.subr.mxu0 0.0
        %1305 = vmatpush1.xpose.msra.mxu0 0.0
        %1306 = vmatprep.subr.mxu0 0.0
        %1307 = vmatpush1.xpose.msra.mxu0 0.0
        %1308 = vmatprep.subr.mxu0 0.0
        %1309 = vmatpush1.xpose.msra.mxu0 0.0
        %1310 = vmatprep.subr.mxu0 0.0
        %1311 = vmatpush1.xpose.msra.mxu0 0.0
        %1312 = vmatprep.subr.mxu0 0.0
        %1313 = vmatpush1.xpose.msra.mxu0 0.0
        %1314 = vmatprep.subr.mxu0 0.0
        %1315 = vmatpush1.xpose.msra.mxu0 0.0
        %1316 = vmatprep.subr.mxu0 0.0
        %1317 = vmatpush1.xpose.msra.mxu0 0.0
        %1318 = vmatprep.subr.mxu0 0.0
        %1319 = vmatpush1.xpose.msra.mxu0 0.0
        %1320 = vmatprep.subr.mxu0 0.0
        %1321 = vmatpush1.xpose.msra.mxu0 %v1290
        %1322 = vmatprep.subr.mxu0 0.0
        %1323 = vmatpush1.xpose.msra.mxu0 %v1288
        %1324 = vmatprep.subr.mxu0 0.0
        %1325 = vmatpush2.xpose.msra.mxu0 0.0
        %1326 = vmatprep.subr.mxu0 0.0
        %1327 = vmatpush2.xpose.msra.mxu0 0.0
        %1328 = vmatprep.subr.mxu0 0.0
        %1329 = vmatpush2.xpose.msra.mxu0 0.0
        %1330 = vmatprep.subr.mxu0 0.0
        %1331 = vmatpush2.xpose.msra.mxu0 0.0
        %1332 = vmatprep.subr.mxu0 0.0
        %1333 = vmatpush2.xpose.msra.mxu0 0.0
        %1334 = vmatprep.subr.mxu0 0.0
        %1335 = vmatpush2.xpose.msra.mxu0 0.0
        %1336 = vmatprep.subr.mxu0 0.0
        %1337 = vmatpush2.xpose.msra.mxu0 0.0
        %1338 = vmatprep.subr.mxu0 0.0
        %1339 = vmatpush2.xpose.msra.mxu0 0.0
        %1340 = vmatprep.subr.mxu0 0.0
        %1341 = vmatpush2.xpose.msra.mxu0 0.0
        %1342 = vmatprep.subr.mxu0 0.0
        %1343 = vmatpush2.xpose.msra.mxu0 0.0
        %1344 = vmatprep.subr.mxu0 0.0
        %1345 = vmatpush2.xpose.msra.mxu0 0.0
        %1346 = vmatprep.subr.mxu0 0.0
        %1347 = vmatpush2.xpose.msra.mxu0 0.0
        %1348 = vmatprep.subr.mxu0 0.0
        %1349 = vmatpush2.xpose.msra.mxu0 0.0
        %1350 = vmatprep.subr.mxu0 0.0
        %1351 = vmatpush2.xpose.msra.mxu0 0.0
        %1352 = vmatprep.subr.mxu0 0.0
        %1353 = vmatpush2.xpose.msra.mxu0 0.0
        %1354 = vmatprep.subr.mxu0 0.0
        %1355 = vmatpush2.xpose.msra.mxu0 0.0
        %1356 = vmatprep.mubr.f32.mxu0 0.0
        %1357 = vmatmul.mubr.f32.gmra.mxu0 %v1284
        %v1358 = vpop.f32.mrf.mxu0
        %v1359 = vadd.f32 0.0, %v1358
        %v1360 = vpop.f32.mrf.mxu0
        %1361 = vmatprep.mubr.f32.mxu0 0.0
        %1362 = vmatmul.mubr.f32.gmra.mxu0 %v1286
        %v1363 = vpop.f32.mrf.mxu0
        %v1364 = vadd.f32 0.0, %v1363
        %v1365 = vpop.f32.mrf.mxu0
        %1366 = vdwg.mxu0
        %v1367 = vmul.f32 %v1359, 0.17677669
        %v1368 = vmul.f32 %v1364, 0.17677669
        %v1369 = vsel %vm1043, %v1367, -inf
        %1370 = vmax.xlane.f32.xlu0 %v1369
        %v1371 = vpop.xlane.xlu0 %1370
        %v1372 = vsel %vm1043, %v1368, -inf
        %1373 = vmax.xlane.f32.xlu0 %v1372
        %v1374 = vpop.xlane.xlu0 %1373
        %v1375 = vsub.f32 %v1367, %v1371
        %v1376 = vsub.f32 %v1368, %v1374
        %v1377 = vmul.f32 %v1375, 1.442695
        %v1378 = vpow.pop %v1377
        %v1379 = vmul.f32 %v1376, 1.442695
        %v1380 = vpow.pop %v1379
        %v1381 = vsel %vm1043, %v1378, 0.0
        %1382 = vadd.xlane.f32.xlu0 %v1381
        %v1383 = vpop.xlane.xlu0 %1382
        %v1384 = vsel %vm1043, %v1380, 0.0
        %1385 = vadd.xlane.f32.xlu0 %v1384
        %v1386 = vpop.xlane.xlu0 %1385
        %v1387 = vrcp.pop %v1383
        %v1388 = vrcp.pop %v1386
        %v1389 = vmul.f32 %v1378, %v1387
        %v1390 = vmul.f32 %v1380, %v1388
        %v1391 = vpack.c.bf16 %v1390, %v1389
        %1392 = vrot.lane.b32.xlu0 %v1067, 64
        %v1393 = vpop.permute.xlu0 %1392
        %v1396 = vsel %vm1043, %v1391, 0
        %1398 = vmatprep.subr.bf16.mxu0 0
        %1399 = vmatpush1.bf16.msra.mxu0 0
        %1400 = vmatprep.subr.bf16.mxu0 0
        %1401 = vmatpush1.bf16.msra.mxu0 0
        %1402 = vmatprep.subr.bf16.mxu0 0
        %1403 = vmatpush1.bf16.msra.mxu0 0
        %1404 = vmatprep.subr.bf16.mxu0 0
        %1405 = vmatpush1.bf16.msra.mxu0 0
        %1406 = vmatprep.subr.bf16.mxu0 0
        %1407 = vmatpush1.bf16.msra.mxu0 0
        %1408 = vmatprep.subr.bf16.mxu0 0
        %1409 = vmatpush1.bf16.msra.mxu0 0
        %1410 = vmatprep.subr.bf16.mxu0 0
        %1411 = vmatpush1.bf16.msra.mxu0 0
        %1412 = vmatprep.subr.bf16.mxu0 0
        %1413 = vmatpush1.bf16.msra.mxu0 %v1393
        %1414 = vmatprep.subr.bf16.mxu0 0
        %1415 = vmatpush2.bf16.msra.mxu0 0
        %1416 = vmatprep.subr.bf16.mxu0 0
        %1417 = vmatpush2.bf16.msra.mxu0 0
        %1418 = vmatprep.subr.bf16.mxu0 0
        %1419 = vmatpush2.bf16.msra.mxu0 0
        %1420 = vmatprep.subr.bf16.mxu0 0
        %1421 = vmatpush2.bf16.msra.mxu0 0
        %1422 = vmatprep.subr.bf16.mxu0 0
        %1423 = vmatpush2.bf16.msra.mxu0 0
        %1424 = vmatprep.subr.bf16.mxu0 0
        %1425 = vmatpush2.bf16.msra.mxu0 0
        %1426 = vmatprep.subr.bf16.mxu0 0
        %1427 = vmatpush2.bf16.msra.mxu0 0
        %1428 = vmatprep.subr.bf16.mxu0 0
        %1429 = vmatpush2.bf16.msra.mxu0 0
        %1430 = vmatprep.mubr.bf16.mxu0 0
        %1431 = vmatmul.mubr.bf16.gmra.mxu0 %v1396
        %v1432 = vpop.f32.mrf.mxu0
        %v1433 = vadd.f32 0.0, %v1432
        %v1434 = vpop.f32.mrf.mxu0
        %v1435 = vpop.f32.mrf.mxu0
        %v1436 = vadd.f32 0.0, %v1435
        %v1437 = vpop.f32.mrf.mxu0
        %1438 = vdwg.mxu0
        %1439 = vrot.lane.b32.xlu0 %v904, 32
        %v1440 = vpop.permute.xlu0 %1439
        %1441 = vrot.lane.b32.xlu0 %v908, 32
        %v1442 = vpop.permute.xlu0 %1441
        %1443 = vrot.lane.b32.xlu0 %v906, 32
        %v1444 = vpop.permute.xlu0 %1443
        %1445 = vrot.lane.b32.xlu0 %v910, 32
        %v1446 = vpop.permute.xlu0 %1445
        %v1447 = vsel %vm953, %v1440, 0
        %v1449 = vsel %vm953, %v1442, 0
        %v1451 = vsel %vm953, %v1444, 0
        %v1453 = vsel %vm953, %v1446, 0
        %1455 = vmatprep.subr.mxu0 0.0
        %1456 = vmatpush1.xpose.msra.mxu0 0.0
        %1457 = vmatprep.subr.mxu0 0.0
        %1458 = vmatpush1.xpose.msra.mxu0 0.0
        %1459 = vmatprep.subr.mxu0 0.0
        %1460 = vmatpush1.xpose.msra.mxu0 0.0
        %1461 = vmatprep.subr.mxu0 0.0
        %1462 = vmatpush1.xpose.msra.mxu0 0.0
        %1463 = vmatprep.subr.mxu0 0.0
        %1464 = vmatpush1.xpose.msra.mxu0 0.0
        %1465 = vmatprep.subr.mxu0 0.0
        %1466 = vmatpush1.xpose.msra.mxu0 0.0
        %1467 = vmatprep.subr.mxu0 0.0
        %1468 = vmatpush1.xpose.msra.mxu0 0.0
        %1469 = vmatprep.subr.mxu0 0.0
        %1470 = vmatpush1.xpose.msra.mxu0 0.0
        %1471 = vmatprep.subr.mxu0 0.0
        %1472 = vmatpush1.xpose.msra.mxu0 0.0
        %1473 = vmatprep.subr.mxu0 0.0
        %1474 = vmatpush1.xpose.msra.mxu0 0.0
        %1475 = vmatprep.subr.mxu0 0.0
        %1476 = vmatpush1.xpose.msra.mxu0 0.0
        %1477 = vmatprep.subr.mxu0 0.0
        %1478 = vmatpush1.xpose.msra.mxu0 0.0
        %1479 = vmatprep.subr.mxu0 0.0
        %1480 = vmatpush1.xpose.msra.mxu0 0.0
        %1481 = vmatprep.subr.mxu0 0.0
        %1482 = vmatpush1.xpose.msra.mxu0 0.0
        %1483 = vmatprep.subr.mxu0 0.0
        %1484 = vmatpush1.xpose.msra.mxu0 %v1453
        %1485 = vmatprep.subr.mxu0 0.0
        %1486 = vmatpush1.xpose.msra.mxu0 %v1451
        %1487 = vmatprep.subr.mxu0 0.0
        %1488 = vmatpush2.xpose.msra.mxu0 0.0
        %1489 = vmatprep.subr.mxu0 0.0
        %1490 = vmatpush2.xpose.msra.mxu0 0.0
        %1491 = vmatprep.subr.mxu0 0.0
        %1492 = vmatpush2.xpose.msra.mxu0 0.0
        %1493 = vmatprep.subr.mxu0 0.0
        %1494 = vmatpush2.xpose.msra.mxu0 0.0
        %1495 = vmatprep.subr.mxu0 0.0
        %1496 = vmatpush2.xpose.msra.mxu0 0.0
        %1497 = vmatprep.subr.mxu0 0.0
        %1498 = vmatpush2.xpose.msra.mxu0 0.0
        %1499 = vmatprep.subr.mxu0 0.0
        %1500 = vmatpush2.xpose.msra.mxu0 0.0
        %1501 = vmatprep.subr.mxu0 0.0
        %1502 = vmatpush2.xpose.msra.mxu0 0.0
        %1503 = vmatprep.subr.mxu0 0.0
        %1504 = vmatpush2.xpose.msra.mxu0 0.0
        %1505 = vmatprep.subr.mxu0 0.0
        %1506 = vmatpush2.xpose.msra.mxu0 0.0
        %1507 = vmatprep.subr.mxu0 0.0
        %1508 = vmatpush2.xpose.msra.mxu0 0.0
        %1509 = vmatprep.subr.mxu0 0.0
        %1510 = vmatpush2.xpose.msra.mxu0 0.0
        %1511 = vmatprep.subr.mxu0 0.0
        %1512 = vmatpush2.xpose.msra.mxu0 0.0
        %1513 = vmatprep.subr.mxu0 0.0
        %1514 = vmatpush2.xpose.msra.mxu0 0.0
        %1515 = vmatprep.subr.mxu0 0.0
        %1516 = vmatpush2.xpose.msra.mxu0 0.0
        %1517 = vmatprep.subr.mxu0 0.0
        %1518 = vmatpush2.xpose.msra.mxu0 0.0
        %1519 = vmatprep.mubr.f32.mxu0 0.0
        %1520 = vmatmul.mubr.f32.gmra.mxu0 %v1447
        %v1521 = vpop.f32.mrf.mxu0
        %v1522 = vadd.f32 0.0, %v1521
        %v1523 = vpop.f32.mrf.mxu0
        %1524 = vmatprep.mubr.f32.mxu0 0.0
        %1525 = vmatmul.mubr.f32.gmra.mxu0 %v1449
        %v1526 = vpop.f32.mrf.mxu0
        %v1527 = vadd.f32 0.0, %v1526
        %v1528 = vpop.f32.mrf.mxu0
        %1529 = vdwg.mxu0
        %v1530 = vmul.f32 %v1522, 0.17677669
        %v1531 = vmul.f32 %v1527, 0.17677669
        %v1532 = vsel %vm1043, %v1530, -inf
        %1533 = vmax.xlane.f32.xlu0 %v1532
        %v1534 = vpop.xlane.xlu0 %1533
        %v1535 = vsel %vm1043, %v1531, -inf
        %1536 = vmax.xlane.f32.xlu0 %v1535
        %v1537 = vpop.xlane.xlu0 %1536
        %v1538 = vsub.f32 %v1530, %v1534
        %v1539 = vsub.f32 %v1531, %v1537
        %v1540 = vmul.f32 %v1538, 1.442695
        %v1541 = vpow.pop %v1540
        %v1542 = vmul.f32 %v1539, 1.442695
        %v1543 = vpow.pop %v1542
        %v1544 = vsel %vm1043, %v1541, 0.0
        %1545 = vadd.xlane.f32.xlu0 %v1544
        %v1546 = vpop.xlane.xlu0 %1545
        %v1547 = vsel %vm1043, %v1543, 0.0
        %1548 = vadd.xlane.f32.xlu0 %v1547
        %v1549 = vpop.xlane.xlu0 %1548
        %v1550 = vrcp.pop %v1546
        %v1551 = vrcp.pop %v1549
        %v1552 = vmul.f32 %v1541, %v1550
        %v1553 = vmul.f32 %v1543, %v1551
        %v1554 = vpack.c.bf16 %v1553, %v1552
        %1555 = vrot.lane.b32.xlu0 %v1067, 32
        %v1556 = vpop.permute.xlu0 %1555
        %v1559 = vsel %vm1043, %v1554, 0
        %1561 = vmatprep.subr.bf16.mxu0 0
        %1562 = vmatpush1.bf16.msra.mxu0 0
        %1563 = vmatprep.subr.bf16.mxu0 0
        %1564 = vmatpush1.bf16.msra.mxu0 0
        %1565 = vmatprep.subr.bf16.mxu0 0
        %1566 = vmatpush1.bf16.msra.mxu0 0
        %1567 = vmatprep.subr.bf16.mxu0 0
        %1568 = vmatpush1.bf16.msra.mxu0 0
        %1569 = vmatprep.subr.bf16.mxu0 0
        %1570 = vmatpush1.bf16.msra.mxu0 0
        %1571 = vmatprep.subr.bf16.mxu0 0
        %1572 = vmatpush1.bf16.msra.mxu0 0
        %1573 = vmatprep.subr.bf16.mxu0 0
        %1574 = vmatpush1.bf16.msra.mxu0 0
        %1575 = vmatprep.subr.bf16.mxu0 0
        %1576 = vmatpush1.bf16.msra.mxu0 %v1556
        %1577 = vmatprep.subr.bf16.mxu0 0
        %1578 = vmatpush2.bf16.msra.mxu0 0
        %1579 = vmatprep.subr.bf16.mxu0 0
        %1580 = vmatpush2.bf16.msra.mxu0 0
        %1581 = vmatprep.subr.bf16.mxu0 0
        %1582 = vmatpush2.bf16.msra.mxu0 0
        %1583 = vmatprep.subr.bf16.mxu0 0
        %1584 = vmatpush2.bf16.msra.mxu0 0
        %1585 = vmatprep.subr.bf16.mxu0 0
        %1586 = vmatpush2.bf16.msra.mxu0 0
        %1587 = vmatprep.subr.bf16.mxu0 0
        %1588 = vmatpush2.bf16.msra.mxu0 0
        %1589 = vmatprep.subr.bf16.mxu0 0
        %1590 = vmatpush2.bf16.msra.mxu0 0
        %1591 = vmatprep.subr.bf16.mxu0 0
        %1592 = vmatpush2.bf16.msra.mxu0 0
        %1593 = vmatprep.mubr.bf16.mxu0 0
        %1594 = vmatmul.mubr.bf16.gmra.mxu0 %v1559
        %v1595 = vpop.f32.mrf.mxu0
        %v1596 = vadd.f32 0.0, %v1595
        %v1597 = vpop.f32.mrf.mxu0
        %v1598 = vpop.f32.mrf.mxu0
        %v1599 = vadd.f32 0.0, %v1598
        %v1600 = vpop.f32.mrf.mxu0
        %1601 = vdwg.mxu0
        %1604 = vrot.lane.b32.xlu0 %v1270, 32
        %v1605 = vpop.permute.xlu0 %1604
        %1606 = vrot.lane.b32.xlu0 %v1273, 32
        %v1607 = vpop.permute.xlu0 %1606
        %1612 = vrot.lane.b32.xlu0 %v1433, 64
        %v1613 = vpop.permute.xlu0 %1612
        %1614 = vrot.lane.b32.xlu0 %v1436, 64
        %v1615 = vpop.permute.xlu0 %1614
        %1620 = vrot.lane.b32.xlu0 %v1596, 96
        %v1621 = vpop.permute.xlu0 %1620
        %1622 = vrot.lane.b32.xlu0 %v1599, 96
        %v1623 = vpop.permute.xlu0 %1622
        %v1626 = vsel %vm953, %v1106, %v1605
        %v1627 = vsel %vm953, %v1109, %v1607
        %vm1628 = vcmask 523264
        %v1629 = vsel %vm1628, %v1626, %v1613
        %v1630 = vsel %vm1628, %v1627, %v1615
        %vm1631 = vcmask 785408
        %v1632 = vsel %vm1631, %v1629, %v1621
        %v1633 = vsel %vm1631, %v1630, %v1623
        %v1634 = vpack.c.bf16 %v1633, %v1632
        %v1635 = vld [vmem:[%s625] sm:$0xf]
        %v1636 = vld [vmem:[%s625 + $0x4] sm:$0xf]
        %v1637 = vld [vmem:[%s625 + $0x8] sm:$0xf]
        %v1638 = vld [vmem:[%s625 + $0xc] sm:$0xf]
        %v1639 = vld [vmem:[%s625 + $0x10] sm:$0xf]
        %v1640 = vld [vmem:[%s625 + $0x14] sm:$0xf]
        %v1641 = vld [vmem:[%s625 + $0x18] sm:$0xf]
        %v1642 = vld [vmem:[%s625 + $0x1c] sm:$0xf]
        %v1643 = vld [vmem:[%s625 + $0x20] sm:$0xf]
        %v1644 = vld [vmem:[%s625 + $0x24] sm:$0xf]
        %v1645 = vld [vmem:[%s625 + $0x28] sm:$0xf]
        %v1646 = vld [vmem:[%s625 + $0x2c] sm:$0xf]
        %v1647 = vld [vmem:[%s625 + $0x30] sm:$0xf]
        %v1648 = vld [vmem:[%s625 + $0x34] sm:$0xf]
        %v1649 = vld [vmem:[%s625 + $0x38] sm:$0xf]
        %v1650 = vld [vmem:[%s625 + $0x3c] sm:$0xf]
        %v1651 = vld [vmem:[%s628] sm:$0x1]
        %v1653 = vlaneseq
        %v1654 = vshrl.u32 %v1653, 7
        %v1655 = vsub.s32 0, %v1654
        %v1656 = vrot.slane %v1651, %v1655
        %v1674 = vunpack.c.l.b16 %v1635
        %v1675 = vunpack.c.l.b16 %v1636
        %v1676 = vunpack.c.l.b16 %v1637
        %v1677 = vunpack.c.l.b16 %v1638
        %v1678 = vunpack.c.l.b16 %v1639
        %v1679 = vunpack.c.l.b16 %v1640
        %v1680 = vunpack.c.l.b16 %v1641
        %v1681 = vunpack.c.l.b16 %v1642
        %v1682 = vunpack.c.l.b16 %v1643
        %v1683 = vunpack.c.l.b16 %v1644
        %v1684 = vunpack.c.l.b16 %v1645
        %v1685 = vunpack.c.l.b16 %v1646
        %v1686 = vunpack.c.l.b16 %v1647
        %v1687 = vunpack.c.l.b16 %v1648
        %v1688 = vunpack.c.l.b16 %v1649
        %v1689 = vunpack.c.l.b16 %v1650
        %v1690 = vpack.c.b16 %v1675, %v1674
        %v1691 = vpack.c.b16 %v1677, %v1676
        %v1692 = vpack.c.b16 %v1679, %v1678
        %v1693 = vpack.c.b16 %v1681, %v1680
        %v1694 = vpack.c.b16 %v1683, %v1682
        %v1695 = vpack.c.b16 %v1685, %v1684
        %v1696 = vpack.c.b16 %v1687, %v1686
        %v1697 = vpack.c.b16 %v1689, %v1688
        %1706 = vmatprep.subr.bf16.mxu0 0
        %1707 = vmatpush1.bf16.msra.mxu0 %v1697
        %1708 = vmatprep.subr.bf16.mxu0 0
        %1709 = vmatpush1.bf16.msra.mxu0 %v1696
        %1710 = vmatprep.subr.bf16.mxu0 0
        %1711 = vmatpush1.bf16.msra.mxu0 %v1695
        %1712 = vmatprep.subr.bf16.mxu0 0
        %1713 = vmatpush1.bf16.msra.mxu0 %v1694
        %1714 = vmatprep.subr.bf16.mxu0 0
        %1715 = vmatpush1.bf16.msra.mxu0 %v1693
        %1716 = vmatprep.subr.bf16.mxu0 0
        %1717 = vmatpush1.bf16.msra.mxu0 %v1692
        %1718 = vmatprep.subr.bf16.mxu0 0
        %1719 = vmatpush1.bf16.msra.mxu0 %v1691
        %1720 = vmatprep.subr.bf16.mxu0 0
        %1721 = vmatpush1.bf16.msra.mxu0 %v1690
        %1722 = vmatprep.subr.bf16.mxu0 0
        %1723 = vmatpush2.bf16.msra.mxu0 0
        %1724 = vmatprep.subr.bf16.mxu0 0
        %1725 = vmatpush2.bf16.msra.mxu0 0
        %1726 = vmatprep.subr.bf16.mxu0 0
        %1727 = vmatpush2.bf16.msra.mxu0 0
        %1728 = vmatprep.subr.bf16.mxu0 0
        %1729 = vmatpush2.bf16.msra.mxu0 0
        %1730 = vmatprep.subr.bf16.mxu0 0
        %1731 = vmatpush2.bf16.msra.mxu0 0
        %1732 = vmatprep.subr.bf16.mxu0 0
        %1733 = vmatpush2.bf16.msra.mxu0 0
        %1734 = vmatprep.subr.bf16.mxu0 0
        %1735 = vmatpush2.bf16.msra.mxu0 0
        %1736 = vmatprep.subr.bf16.mxu0 0
        %1737 = vmatpush2.bf16.msra.mxu0 0
        %1738 = vmatprep.mubr.bf16.mxu0 0
        %1739 = vmatmul.mubr.bf16.gmra.mxu0 %v1634
        %v1740 = vpop.f32.mrf.mxu0
        %v1741 = vadd.f32 %v1656, %v1740
        %v1742 = vpop.f32.mrf.mxu0
        %v1743 = vpop.f32.mrf.mxu0
        %v1744 = vadd.f32 %v1656, %v1743
        %v1745 = vpop.f32.mrf.mxu0
        %1746 = vdwg.mxu0
        %v1747 = vadd.f32 %v665, %v1741
        %v1748 = vadd.f32 %v666, %v1744
        %v1749 = vld [vmem:[%s631] sm:$0x1]
        %v1750 = vld [vmem:[%s634] sm:$0x1]
        %1751 = vadd.xlane.f32.xlu0 %v1747
        %v1752 = vpop.xlane.xlu0 %1751
        %1753 = vadd.xlane.f32.xlu0 %v1748
        %v1754 = vpop.xlane.xlu0 %1753
        %v1755 = vmul.f32 %v1752, %v673
        %v1756 = vmul.f32 %v1754, %v673
        %v1757 = vsub.f32 %v1747, %v1755
        %v1758 = vsub.f32 %v1748, %v1756
        %v1759 = vmul.f32 %v1757, %v1757
        %v1760 = vmul.f32 %v1758, %v1758
        %1761 = vadd.xlane.f32.xlu0 %v1759
        %v1762 = vpop.xlane.xlu0 %1761
        %1763 = vadd.xlane.f32.xlu0 %v1760
        %v1764 = vpop.xlane.xlu0 %1763
        %v1765 = vmul.f32 %v1762, %v673
        %v1766 = vmul.f32 %v1764, %v673
        %v1767 = vadd.f32 %v1765, 1e-05
        %v1768 = vadd.f32 %v1766, 1e-05
        %v1769 = vrsqrt.pop %v1767
        %v1770 = vrsqrt.pop %v1768
        %v1771 = vmul.f32 %v1757, %v1769
        %v1772 = vmul.f32 %v1758, %v1770
        %v1774 = vlaneseq
        %v1775 = vshrl.u32 %v1774, 7
        %v1776 = vsub.s32 0, %v1775
        %v1777 = vrot.slane %v1749, %v1776
        %v1779 = vmul.f32 %v1771, %v1777
        %v1780 = vmul.f32 %v1772, %v1777
        %v1782 = vlaneseq
        %v1783 = vshrl.u32 %v1782, 7
        %v1784 = vsub.s32 0, %v1783
        %v1785 = vrot.slane %v1750, %v1784
        %v1787 = vadd.f32 %v1779, %v1785
        %v1788 = vadd.f32 %v1780, %v1785
        %v1789 = vpack.c.bf16 %v1788, %v1787
        %v1790 = vld [vmem:[%s639] sm:$0xff]
        %v1791 = vld [vmem:[%s639 + $0x8] sm:$0xff]
        %v1792 = vld [vmem:[%s639 + $0x10] sm:$0xff]
        %v1793 = vld [vmem:[%s639 + $0x18] sm:$0xff]
        %v1794 = vld [vmem:[%s639 + $0x20] sm:$0xff]
        %v1795 = vld [vmem:[%s639 + $0x28] sm:$0xff]
        %v1796 = vld [vmem:[%s639 + $0x30] sm:$0xff]
        %v1797 = vld [vmem:[%s639 + $0x38] sm:$0xff]
        %v1798 = vld [vmem:[%s639 + $0x40] sm:$0xff]
        %v1799 = vld [vmem:[%s639 + $0x48] sm:$0xff]
        %v1800 = vld [vmem:[%s639 + $0x50] sm:$0xff]
        %v1801 = vld [vmem:[%s639 + $0x58] sm:$0xff]
        %v1802 = vld [vmem:[%s639 + $0x60] sm:$0xff]
        %v1803 = vld [vmem:[%s639 + $0x68] sm:$0xff]
        %v1804 = vld [vmem:[%s639 + $0x70] sm:$0xff]
        %v1805 = vld [vmem:[%s639 + $0x78] sm:$0xff]
        %v1806 = vld [vmem:[%s639 + $0x80] sm:$0xff]
        %v1807 = vld [vmem:[%s639 + $0x88] sm:$0xff]
        %v1808 = vld [vmem:[%s639 + $0x90] sm:$0xff]
        %v1809 = vld [vmem:[%s639 + $0x98] sm:$0xff]
        %v1810 = vld [vmem:[%s639 + $0xa0] sm:$0xff]
        %v1811 = vld [vmem:[%s639 + $0xa8] sm:$0xff]
        %v1812 = vld [vmem:[%s639 + $0xb0] sm:$0xff]
        %v1813 = vld [vmem:[%s639 + $0xb8] sm:$0xff]
        %v1814 = vld [vmem:[%s639 + $0xc0] sm:$0xff]
        %v1815 = vld [vmem:[%s639 + $0xc8] sm:$0xff]
        %v1816 = vld [vmem:[%s639 + $0xd0] sm:$0xff]
        %v1817 = vld [vmem:[%s639 + $0xd8] sm:$0xff]
        %v1818 = vld [vmem:[%s639 + $0xe0] sm:$0xff]
        %v1819 = vld [vmem:[%s639 + $0xe8] sm:$0xff]
        %v1820 = vld [vmem:[%s639 + $0xf0] sm:$0xff]
        %v1821 = vld [vmem:[%s639 + $0xf8] sm:$0xff]
        %v1822 = vld [vmem:[%s643] sm:$0xf]
        %v1824 = vlaneseq
        %v1825 = vshrl.u32 %v1824, 7
        %v1826 = vsub.s32 0, %v1825
        %v1827 = vrot.slane %v1822, %v1826
        %v1828 = vlaneseq
        %v1829 = vshrl.u32 %v1828, 7
        %v1830 = vsub.s32 1, %v1829
        %v1831 = vrot.slane %v1822, %v1830
        %v1832 = vlaneseq
        %v1833 = vshrl.u32 %v1832, 7
        %v1834 = vsub.s32 2, %v1833
        %v1835 = vrot.slane %v1822, %v1834
        %v1836 = vlaneseq
        %v1837 = vshrl.u32 %v1836, 7
        %v1838 = vsub.s32 3, %v1837
        %v1839 = vrot.slane %v1822, %v1838
        %v1876 = vunpack.c.l.b16 %v1790
        %v1877 = vunpack.c.h.b16 %v1790
        %v1878 = vunpack.c.l.b16 %v1791
        %v1879 = vunpack.c.h.b16 %v1791
        %v1880 = vunpack.c.l.b16 %v1792
        %v1881 = vunpack.c.h.b16 %v1792
        %v1882 = vunpack.c.l.b16 %v1793
        %v1883 = vunpack.c.h.b16 %v1793
        %v1884 = vunpack.c.l.b16 %v1794
        %v1885 = vunpack.c.h.b16 %v1794
        %v1886 = vunpack.c.l.b16 %v1795
        %v1887 = vunpack.c.h.b16 %v1795
        %v1888 = vunpack.c.l.b16 %v1796
        %v1889 = vunpack.c.h.b16 %v1796
        %v1890 = vunpack.c.l.b16 %v1797
        %v1891 = vunpack.c.h.b16 %v1797
        %v1892 = vunpack.c.l.b16 %v1798
        %v1893 = vunpack.c.h.b16 %v1798
        %v1894 = vunpack.c.l.b16 %v1799
        %v1895 = vunpack.c.h.b16 %v1799
        %v1896 = vunpack.c.l.b16 %v1800
        %v1897 = vunpack.c.h.b16 %v1800
        %v1898 = vunpack.c.l.b16 %v1801
        %v1899 = vunpack.c.h.b16 %v1801
        %v1900 = vunpack.c.l.b16 %v1802
        %v1901 = vunpack.c.h.b16 %v1802
        %v1902 = vunpack.c.l.b16 %v1803
        %v1903 = vunpack.c.h.b16 %v1803
        %v1904 = vunpack.c.l.b16 %v1804
        %v1905 = vunpack.c.h.b16 %v1804
        %v1906 = vunpack.c.l.b16 %v1805
        %v1907 = vunpack.c.h.b16 %v1805
        %v1908 = vunpack.c.l.b16 %v1806
        %v1909 = vunpack.c.h.b16 %v1806
        %v1910 = vunpack.c.l.b16 %v1807
        %v1911 = vunpack.c.h.b16 %v1807
        %v1912 = vunpack.c.l.b16 %v1808
        %v1913 = vunpack.c.h.b16 %v1808
        %v1914 = vunpack.c.l.b16 %v1809
        %v1915 = vunpack.c.h.b16 %v1809
        %v1916 = vunpack.c.l.b16 %v1810
        %v1917 = vunpack.c.h.b16 %v1810
        %v1918 = vunpack.c.l.b16 %v1811
        %v1919 = vunpack.c.h.b16 %v1811
        %v1920 = vunpack.c.l.b16 %v1812
        %v1921 = vunpack.c.h.b16 %v1812
        %v1922 = vunpack.c.l.b16 %v1813
        %v1923 = vunpack.c.h.b16 %v1813
        %v1924 = vunpack.c.l.b16 %v1814
        %v1925 = vunpack.c.h.b16 %v1814
        %v1926 = vunpack.c.l.b16 %v1815
        %v1927 = vunpack.c.h.b16 %v1815
        %v1928 = vunpack.c.l.b16 %v1816
        %v1929 = vunpack.c.h.b16 %v1816
        %v1930 = vunpack.c.l.b16 %v1817
        %v1931 = vunpack.c.h.b16 %v1817
        %v1932 = vunpack.c.l.b16 %v1818
        %v1933 = vunpack.c.h.b16 %v1818
        %v1934 = vunpack.c.l.b16 %v1819
        %v1935 = vunpack.c.h.b16 %v1819
        %v1936 = vunpack.c.l.b16 %v1820
        %v1937 = vunpack.c.h.b16 %v1820
        %v1938 = vunpack.c.l.b16 %v1821
        %v1939 = vunpack.c.h.b16 %v1821
        %v1940 = vpack.c.b16 %v1880, %v1876
        %v1941 = vpack.c.b16 %v1881, %v1877
        %v1942 = vpack.c.b16 %v1882, %v1878
        %v1943 = vpack.c.b16 %v1883, %v1879
        %v1944 = vpack.c.b16 %v1888, %v1884
        %v1945 = vpack.c.b16 %v1889, %v1885
        %v1946 = vpack.c.b16 %v1890, %v1886
        %v1947 = vpack.c.b16 %v1891, %v1887
        %v1948 = vpack.c.b16 %v1896, %v1892
        %v1949 = vpack.c.b16 %v1897, %v1893
        %v1950 = vpack.c.b16 %v1898, %v1894
        %v1951 = vpack.c.b16 %v1899, %v1895
        %v1952 = vpack.c.b16 %v1904, %v1900
        %v1953 = vpack.c.b16 %v1905, %v1901
        %v1954 = vpack.c.b16 %v1906, %v1902
        %v1955 = vpack.c.b16 %v1907, %v1903
        %v1956 = vpack.c.b16 %v1912, %v1908
        %v1957 = vpack.c.b16 %v1913, %v1909
        %v1958 = vpack.c.b16 %v1914, %v1910
        %v1959 = vpack.c.b16 %v1915, %v1911
        %v1960 = vpack.c.b16 %v1920, %v1916
        %v1961 = vpack.c.b16 %v1921, %v1917
        %v1962 = vpack.c.b16 %v1922, %v1918
        %v1963 = vpack.c.b16 %v1923, %v1919
        %v1964 = vpack.c.b16 %v1928, %v1924
        %v1965 = vpack.c.b16 %v1929, %v1925
        %v1966 = vpack.c.b16 %v1930, %v1926
        %v1967 = vpack.c.b16 %v1931, %v1927
        %v1968 = vpack.c.b16 %v1936, %v1932
        %v1969 = vpack.c.b16 %v1937, %v1933
        %v1970 = vpack.c.b16 %v1938, %v1934
        %v1971 = vpack.c.b16 %v1939, %v1935
        %2004 = vmatprep.subr.bf16.mxu0 %v1969
        %2005 = vmatpush1.bf16.msra.mxu0 %v1968
        %2006 = vmatprep.subr.bf16.mxu0 %v1965
        %2007 = vmatpush1.bf16.msra.mxu0 %v1964
        %2008 = vmatprep.subr.bf16.mxu0 %v1961
        %2009 = vmatpush1.bf16.msra.mxu0 %v1960
        %2010 = vmatprep.subr.bf16.mxu0 %v1957
        %2011 = vmatpush1.bf16.msra.mxu0 %v1956
        %2012 = vmatprep.subr.bf16.mxu0 %v1953
        %2013 = vmatpush1.bf16.msra.mxu0 %v1952
        %2014 = vmatprep.subr.bf16.mxu0 %v1949
        %2015 = vmatpush1.bf16.msra.mxu0 %v1948
        %2016 = vmatprep.subr.bf16.mxu0 %v1945
        %2017 = vmatpush1.bf16.msra.mxu0 %v1944
        %2018 = vmatprep.subr.bf16.mxu0 %v1941
        %2019 = vmatpush1.bf16.msra.mxu0 %v1940
        %2020 = vmatprep.subr.bf16.mxu0 0
        %2021 = vmatpush2.bf16.msra.mxu0 0
        %2022 = vmatprep.subr.bf16.mxu0 0
        %2023 = vmatpush2.bf16.msra.mxu0 0
        %2024 = vmatprep.subr.bf16.mxu0 0
        %2025 = vmatpush2.bf16.msra.mxu0 0
        %2026 = vmatprep.subr.bf16.mxu0 0
        %2027 = vmatpush2.bf16.msra.mxu0 0
        %2028 = vmatprep.subr.bf16.mxu0 0
        %2029 = vmatpush2.bf16.msra.mxu0 0
        %2030 = vmatprep.subr.bf16.mxu0 0
        %2031 = vmatpush2.bf16.msra.mxu0 0
        %2032 = vmatprep.subr.bf16.mxu0 0
        %2033 = vmatpush2.bf16.msra.mxu0 0
        %2034 = vmatprep.subr.bf16.mxu0 0
        %2035 = vmatpush2.bf16.msra.mxu0 0
        %2036 = vmatprep.mubr.bf16.mxu0 0
        %2037 = vmatmul.mubr.bf16.gmra.mxu0 %v1789
        %v2038 = vpop.f32.mrf.mxu0
        %v2039 = vadd.f32 %v1827, %v2038
        %v2040 = vpop.f32.mrf.mxu0
        %v2041 = vadd.f32 %v1831, %v2040
        %v2042 = vpop.f32.mrf.mxu0
        %v2043 = vadd.f32 %v1827, %v2042
        %v2044 = vpop.f32.mrf.mxu0
        %v2045 = vadd.f32 %v1831, %v2044
        %2046 = vdwg.mxu0
        %2047 = vmatprep.subr.bf16.mxu0 %v1971
        %2048 = vmatpush1.bf16.msra.mxu0 %v1970
        %2049 = vmatprep.subr.bf16.mxu0 %v1967
        %2050 = vmatpush1.bf16.msra.mxu0 %v1966
        %2051 = vmatprep.subr.bf16.mxu0 %v1963
        %2052 = vmatpush1.bf16.msra.mxu0 %v1962
        %2053 = vmatprep.subr.bf16.mxu0 %v1959
        %2054 = vmatpush1.bf16.msra.mxu0 %v1958
        %2055 = vmatprep.subr.bf16.mxu0 %v1955
        %2056 = vmatpush1.bf16.msra.mxu0 %v1954
        %2057 = vmatprep.subr.bf16.mxu0 %v1951
        %2058 = vmatpush1.bf16.msra.mxu0 %v1950
        %2059 = vmatprep.subr.bf16.mxu0 %v1947
        %2060 = vmatpush1.bf16.msra.mxu0 %v1946
        %2061 = vmatprep.subr.bf16.mxu0 %v1943
        %2062 = vmatpush1.bf16.msra.mxu0 %v1942
        %2063 = vmatprep.subr.bf16.mxu0 0
        %2064 = vmatpush2.bf16.msra.mxu0 0
        %2065 = vmatprep.subr.bf16.mxu0 0
        %2066 = vmatpush2.bf16.msra.mxu0 0
        %2067 = vmatprep.subr.bf16.mxu0 0
        %2068 = vmatpush2.bf16.msra.mxu0 0
        %2069 = vmatprep.subr.bf16.mxu0 0
        %2070 = vmatpush2.bf16.msra.mxu0 0
        %2071 = vmatprep.subr.bf16.mxu0 0
        %2072 = vmatpush2.bf16.msra.mxu0 0
        %2073 = vmatprep.subr.bf16.mxu0 0
        %2074 = vmatpush2.bf16.msra.mxu0 0
        %2075 = vmatprep.subr.bf16.mxu0 0
        %2076 = vmatpush2.bf16.msra.mxu0 0
        %2077 = vmatprep.subr.bf16.mxu0 0
        %2078 = vmatpush2.bf16.msra.mxu0 0
        %2079 = vmatprep.mubr.bf16.mxu0 0
        %2080 = vmatmul.mubr.bf16.gmra.mxu0 %v1789
        %v2081 = vpop.f32.mrf.mxu0
        %v2082 = vadd.f32 %v1835, %v2081
        %v2083 = vpop.f32.mrf.mxu0
        %v2084 = vadd.f32 %v1839, %v2083
        %v2085 = vpop.f32.mrf.mxu0
        %v2086 = vadd.f32 %v1835, %v2085
        %v2087 = vpop.f32.mrf.mxu0
        %v2088 = vadd.f32 %v1839, %v2087
        %2089 = vdwg.mxu0
        %v2090 = vmul.f32 %v2039, %v2039
        %v2091 = vmul.f32 %v2041, %v2041
        %v2092 = vmul.f32 %v2082, %v2082
        %v2093 = vmul.f32 %v2084, %v2084
        %v2094 = vmul.f32 %v2043, %v2043
        %v2095 = vmul.f32 %v2045, %v2045
        %v2096 = vmul.f32 %v2086, %v2086
        %v2097 = vmul.f32 %v2088, %v2088
        %v2098 = vmul.f32 %v2039, %v2090
        %v2099 = vmul.f32 %v2041, %v2091
        %v2100 = vmul.f32 %v2082, %v2092
        %v2101 = vmul.f32 %v2084, %v2093
        %v2102 = vmul.f32 %v2043, %v2094
        %v2103 = vmul.f32 %v2045, %v2095
        %v2104 = vmul.f32 %v2086, %v2096
        %v2105 = vmul.f32 %v2088, %v2097
        %v2106 = vmul.f32 %v2098, 0.044715
        %v2107 = vmul.f32 %v2099, 0.044715
        %v2108 = vmul.f32 %v2100, 0.044715
        %v2109 = vmul.f32 %v2101, 0.044715
        %v2110 = vmul.f32 %v2102, 0.044715
        %v2111 = vmul.f32 %v2103, 0.044715
        %v2112 = vmul.f32 %v2104, 0.044715
        %v2113 = vmul.f32 %v2105, 0.044715
        %v2114 = vadd.f32 %v2039, %v2106
        %v2115 = vadd.f32 %v2041, %v2107
        %v2116 = vadd.f32 %v2082, %v2108
        %v2117 = vadd.f32 %v2084, %v2109
        %v2118 = vadd.f32 %v2043, %v2110
        %v2119 = vadd.f32 %v2045, %v2111
        %v2120 = vadd.f32 %v2086, %v2112
        %v2121 = vadd.f32 %v2088, %v2113
        %v2122 = vmul.f32 %v2114, 0.7978846
        %v2123 = vmul.f32 %v2115, 0.7978846
        %v2124 = vmul.f32 %v2116, 0.7978846
        %v2125 = vmul.f32 %v2117, 0.7978846
        %v2126 = vmul.f32 %v2118, 0.7978846
        %v2127 = vmul.f32 %v2119, 0.7978846
        %v2128 = vmul.f32 %v2120, 0.7978846
        %v2129 = vmul.f32 %v2121, 0.7978846
        %v2130 = vtanh.pop %v2122
        %v2131 = vtanh.pop %v2123
        %v2132 = vtanh.pop %v2124
        %v2133 = vtanh.pop %v2125
        %v2134 = vtanh.pop %v2126
        %v2135 = vtanh.pop %v2127
        %v2136 = vtanh.pop %v2128
        %v2137 = vtanh.pop %v2129
        %v2138 = vadd.f32 %v2130, 1.0
        %v2139 = vadd.f32 %v2131, 1.0
        %v2140 = vadd.f32 %v2132, 1.0
        %v2141 = vadd.f32 %v2133, 1.0
        %v2142 = vadd.f32 %v2134, 1.0
        %v2143 = vadd.f32 %v2135, 1.0
        %v2144 = vadd.f32 %v2136, 1.0
        %v2145 = vadd.f32 %v2137, 1.0
        %v2146 = vmul.f32 %v2138, 0.5
        %v2147 = vmul.f32 %v2139, 0.5
        %v2148 = vmul.f32 %v2140, 0.5
        %v2149 = vmul.f32 %v2141, 0.5
        %v2150 = vmul.f32 %v2142, 0.5
        %v2151 = vmul.f32 %v2143, 0.5
        %v2152 = vmul.f32 %v2144, 0.5
        %v2153 = vmul.f32 %v2145, 0.5
        %v2154 = vmul.f32 %v2039, %v2146
        %v2155 = vmul.f32 %v2041, %v2147
        %v2156 = vmul.f32 %v2082, %v2148
        %v2157 = vmul.f32 %v2084, %v2149
        %v2158 = vmul.f32 %v2043, %v2150
        %v2159 = vmul.f32 %v2045, %v2151
        %v2160 = vmul.f32 %v2086, %v2152
        %v2161 = vmul.f32 %v2088, %v2153
        %v2162 = vpack.c.bf16 %v2158, %v2154
        %v2163 = vpack.c.bf16 %v2159, %v2155
        %v2164 = vpack.c.bf16 %v2160, %v2156
        %v2165 = vpack.c.bf16 %v2161, %v2157
        %v2166 = vld [vmem:[%s648] sm:$0xf]
        %v2167 = vld [vmem:[%s648 + $0x4] sm:$0xf]
        %v2168 = vld [vmem:[%s648 + $0x8] sm:$0xf]
        %v2169 = vld [vmem:[%s648 + $0xc] sm:$0xf]
        %v2170 = vld [vmem:[%s648 + $0x10] sm:$0xf]
        %v2171 = vld [vmem:[%s648 + $0x14] sm:$0xf]
        %v2172 = vld [vmem:[%s648 + $0x18] sm:$0xf]
        %v2173 = vld [vmem:[%s648 + $0x1c] sm:$0xf]
        %v2174 = vld [vmem:[%s648 + $0x20] sm:$0xf]
        %v2175 = vld [vmem:[%s648 + $0x24] sm:$0xf]
        %v2176 = vld [vmem:[%s648 + $0x28] sm:$0xf]
        %v2177 = vld [vmem:[%s648 + $0x2c] sm:$0xf]
        %v2178 = vld [vmem:[%s648 + $0x30] sm:$0xf]
        %v2179 = vld [vmem:[%s648 + $0x34] sm:$0xf]
        %v2180 = vld [vmem:[%s648 + $0x38] sm:$0xf]
        %v2181 = vld [vmem:[%s648 + $0x3c] sm:$0xf]
        %v2182 = vld [vmem:[%s648 + $0x40] sm:$0xf]
        %v2183 = vld [vmem:[%s648 + $0x44] sm:$0xf]
        %v2184 = vld [vmem:[%s648 + $0x48] sm:$0xf]
        %v2185 = vld [vmem:[%s648 + $0x4c] sm:$0xf]
        %v2186 = vld [vmem:[%s648 + $0x50] sm:$0xf]
        %v2187 = vld [vmem:[%s648 + $0x54] sm:$0xf]
        %v2188 = vld [vmem:[%s648 + $0x58] sm:$0xf]
        %v2189 = vld [vmem:[%s648 + $0x5c] sm:$0xf]
        %v2190 = vld [vmem:[%s648 + $0x60] sm:$0xf]
        %v2191 = vld [vmem:[%s648 + $0x64] sm:$0xf]
        %v2192 = vld [vmem:[%s648 + $0x68] sm:$0xf]
        %v2193 = vld [vmem:[%s648 + $0x6c] sm:$0xf]
        %v2194 = vld [vmem:[%s648 + $0x70] sm:$0xf]
        %v2195 = vld [vmem:[%s648 + $0x74] sm:$0xf]
        %v2196 = vld [vmem:[%s648 + $0x78] sm:$0xf]
        %v2197 = vld [vmem:[%s648 + $0x7c] sm:$0xf]
        %v2198 = vld [vmem:[%s648 + $0x80] sm:$0xf]
        %v2199 = vld [vmem:[%s648 + $0x84] sm:$0xf]
        %v2200 = vld [vmem:[%s648 + $0x88] sm:$0xf]
        %v2201 = vld [vmem:[%s648 + $0x8c] sm:$0xf]
        %v2202 = vld [vmem:[%s648 + $0x90] sm:$0xf]
        %v2203 = vld [vmem:[%s648 + $0x94] sm:$0xf]
        %v2204 = vld [vmem:[%s648 + $0x98] sm:$0xf]
        %v2205 = vld [vmem:[%s648 + $0x9c] sm:$0xf]
        %v2206 = vld [vmem:[%s648 + $0xa0] sm:$0xf]
        %v2207 = vld [vmem:[%s648 + $0xa4] sm:$0xf]
        %v2208 = vld [vmem:[%s648 + $0xa8] sm:$0xf]
        %v2209 = vld [vmem:[%s648 + $0xac] sm:$0xf]
        %v2210 = vld [vmem:[%s648 + $0xb0] sm:$0xf]
        %v2211 = vld [vmem:[%s648 + $0xb4] sm:$0xf]
        %v2212 = vld [vmem:[%s648 + $0xb8] sm:$0xf]
        %v2213 = vld [vmem:[%s648 + $0xbc] sm:$0xf]
        %v2214 = vld [vmem:[%s648 + $0xc0] sm:$0xf]
        %v2215 = vld [vmem:[%s648 + $0xc4] sm:$0xf]
        %v2216 = vld [vmem:[%s648 + $0xc8] sm:$0xf]
        %v2217 = vld [vmem:[%s648 + $0xcc] sm:$0xf]
        %v2218 = vld [vmem:[%s648 + $0xd0] sm:$0xf]
        %v2219 = vld [vmem:[%s648 + $0xd4] sm:$0xf]
        %v2220 = vld [vmem:[%s648 + $0xd8] sm:$0xf]
        %v2221 = vld [vmem:[%s648 + $0xdc] sm:$0xf]
        %v2222 = vld [vmem:[%s648 + $0xe0] sm:$0xf]
        %v2223 = vld [vmem:[%s648 + $0xe4] sm:$0xf]
        %v2224 = vld [vmem:[%s648 + $0xe8] sm:$0xf]
        %v2225 = vld [vmem:[%s648 + $0xec] sm:$0xf]
        %v2226 = vld [vmem:[%s648 + $0xf0] sm:$0xf]
        %v2227 = vld [vmem:[%s648 + $0xf4] sm:$0xf]
        %v2228 = vld [vmem:[%s648 + $0xf8] sm:$0xf]
        %v2229 = vld [vmem:[%s648 + $0xfc] sm:$0xf]
        %v2230 = vld [vmem:[%s651] sm:$0x1]
        %v2232 = vlaneseq
        %v2233 = vshrl.u32 %v2232, 7
        %v2234 = vsub.s32 0, %v2233
        %v2235 = vrot.slane %v2230, %v2234
        %v2301 = vunpack.c.l.b16 %v2166
        %v2302 = vunpack.c.l.b16 %v2167
        %v2303 = vunpack.c.l.b16 %v2168
        %v2304 = vunpack.c.l.b16 %v2169
        %v2305 = vunpack.c.l.b16 %v2170
        %v2306 = vunpack.c.l.b16 %v2171
        %v2307 = vunpack.c.l.b16 %v2172
        %v2308 = vunpack.c.l.b16 %v2173
        %v2309 = vunpack.c.l.b16 %v2174
        %v2310 = vunpack.c.l.b16 %v2175
        %v2311 = vunpack.c.l.b16 %v2176
        %v2312 = vunpack.c.l.b16 %v2177
        %v2313 = vunpack.c.l.b16 %v2178
        %v2314 = vunpack.c.l.b16 %v2179
        %v2315 = vunpack.c.l.b16 %v2180
        %v2316 = vunpack.c.l.b16 %v2181
        %v2317 = vunpack.c.l.b16 %v2182
        %v2318 = vunpack.c.l.b16 %v2183
        %v2319 = vunpack.c.l.b16 %v2184
        %v2320 = vunpack.c.l.b16 %v2185
        %v2321 = vunpack.c.l.b16 %v2186
        %v2322 = vunpack.c.l.b16 %v2187
        %v2323 = vunpack.c.l.b16 %v2188
        %v2324 = vunpack.c.l.b16 %v2189
        %v2325 = vunpack.c.l.b16 %v2190
        %v2326 = vunpack.c.l.b16 %v2191
        %v2327 = vunpack.c.l.b16 %v2192
        %v2328 = vunpack.c.l.b16 %v2193
        %v2329 = vunpack.c.l.b16 %v2194
        %v2330 = vunpack.c.l.b16 %v2195
        %v2331 = vunpack.c.l.b16 %v2196
        %v2332 = vunpack.c.l.b16 %v2197
        %v2333 = vunpack.c.l.b16 %v2198
        %v2334 = vunpack.c.l.b16 %v2199
        %v2335 = vunpack.c.l.b16 %v2200
        %v2336 = vunpack.c.l.b16 %v2201
        %v2337 = vunpack.c.l.b16 %v2202
        %v2338 = vunpack.c.l.b16 %v2203
        %v2339 = vunpack.c.l.b16 %v2204
        %v2340 = vunpack.c.l.b16 %v2205
        %v2341 = vunpack.c.l.b16 %v2206
        %v2342 = vunpack.c.l.b16 %v2207
        %v2343 = vunpack.c.l.b16 %v2208
        %v2344 = vunpack.c.l.b16 %v2209
        %v2345 = vunpack.c.l.b16 %v2210
        %v2346 = vunpack.c.l.b16 %v2211
        %v2347 = vunpack.c.l.b16 %v2212
        %v2348 = vunpack.c.l.b16 %v2213
        %v2349 = vunpack.c.l.b16 %v2214
        %v2350 = vunpack.c.l.b16 %v2215
        %v2351 = vunpack.c.l.b16 %v2216
        %v2352 = vunpack.c.l.b16 %v2217
        %v2353 = vunpack.c.l.b16 %v2218
        %v2354 = vunpack.c.l.b16 %v2219
        %v2355 = vunpack.c.l.b16 %v2220
        %v2356 = vunpack.c.l.b16 %v2221
        %v2357 = vunpack.c.l.b16 %v2222
        %v2358 = vunpack.c.l.b16 %v2223
        %v2359 = vunpack.c.l.b16 %v2224
        %v2360 = vunpack.c.l.b16 %v2225
        %v2361 = vunpack.c.l.b16 %v2226
        %v2362 = vunpack.c.l.b16 %v2227
        %v2363 = vunpack.c.l.b16 %v2228
        %v2364 = vunpack.c.l.b16 %v2229
        %v2365 = vpack.c.b16 %v2302, %v2301
        %v2366 = vpack.c.b16 %v2304, %v2303
        %v2367 = vpack.c.b16 %v2306, %v2305
        %v2368 = vpack.c.b16 %v2308, %v2307
        %v2369 = vpack.c.b16 %v2310, %v2309
        %v2370 = vpack.c.b16 %v2312, %v2311
        %v2371 = vpack.c.b16 %v2314, %v2313
        %v2372 = vpack.c.b16 %v2316, %v2315
        %v2373 = vpack.c.b16 %v2318, %v2317
        %v2374 = vpack.c.b16 %v2320, %v2319
        %v2375 = vpack.c.b16 %v2322, %v2321
        %v2376 = vpack.c.b16 %v2324, %v2323
        %v2377 = vpack.c.b16 %v2326, %v2325
        %v2378 = vpack.c.b16 %v2328, %v2327
        %v2379 = vpack.c.b16 %v2330, %v2329
        %v2380 = vpack.c.b16 %v2332, %v2331
        %v2381 = vpack.c.b16 %v2334, %v2333
        %v2382 = vpack.c.b16 %v2336, %v2335
        %v2383 = vpack.c.b16 %v2338, %v2337
        %v2384 = vpack.c.b16 %v2340, %v2339
        %v2385 = vpack.c.b16 %v2342, %v2341
        %v2386 = vpack.c.b16 %v2344, %v2343
        %v2387 = vpack.c.b16 %v2346, %v2345
        %v2388 = vpack.c.b16 %v2348, %v2347
        %v2389 = vpack.c.b16 %v2350, %v2349
        %v2390 = vpack.c.b16 %v2352, %v2351
        %v2391 = vpack.c.b16 %v2354, %v2353
        %v2392 = vpack.c.b16 %v2356, %v2355
        %v2393 = vpack.c.b16 %v2358, %v2357
        %v2394 = vpack.c.b16 %v2360, %v2359
        %v2395 = vpack.c.b16 %v2362, %v2361
        %v2396 = vpack.c.b16 %v2364, %v2363
        %2429 = vmatprep.subr.bf16.mxu0 0
        %2430 = vmatpush1.bf16.msra.mxu0 %v2372
        %2431 = vmatprep.subr.bf16.mxu0 0
        %2432 = vmatpush1.bf16.msra.mxu0 %v2371
        %2433 = vmatprep.subr.bf16.mxu0 0
        %2434 = vmatpush1.bf16.msra.mxu0 %v2370
        %2435 = vmatprep.subr.bf16.mxu0 0
        %2436 = vmatpush1.bf16.msra.mxu0 %v2369
        %2437 = vmatprep.subr.bf16.mxu0 0
        %2438 = vmatpush1.bf16.msra.mxu0 %v2368
        %2439 = vmatprep.subr.bf16.mxu0 0
        %2440 = vmatpush1.bf16.msra.mxu0 %v2367
        %2441 = vmatprep.subr.bf16.mxu0 0
        %2442 = vmatpush1.bf16.msra.mxu0 %v2366
        %2443 = vmatprep.subr.bf16.mxu0 0
        %2444 = vmatpush1.bf16.msra.mxu0 %v2365
        %2445 = vmatprep.subr.bf16.mxu0 0
        %2446 = vmatpush2.bf16.msra.mxu0 %v2380
        %2447 = vmatprep.subr.bf16.mxu0 0
        %2448 = vmatpush2.bf16.msra.mxu0 %v2379
        %2449 = vmatprep.subr.bf16.mxu0 0
        %2450 = vmatpush2.bf16.msra.mxu0 %v2378
        %2451 = vmatprep.subr.bf16.mxu0 0
        %2452 = vmatpush2.bf16.msra.mxu0 %v2377
        %2453 = vmatprep.subr.bf16.mxu0 0
        %2454 = vmatpush2.bf16.msra.mxu0 %v2376
        %2455 = vmatprep.subr.bf16.mxu0 0
        %2456 = vmatpush2.bf16.msra.mxu0 %v2375
        %2457 = vmatprep.subr.bf16.mxu0 0
        %2458 = vmatpush2.bf16.msra.mxu0 %v2374
        %2459 = vmatprep.subr.bf16.mxu0 0
        %2460 = vmatpush2.bf16.msra.mxu0 %v2373
        %2461 = vmatprep.mubr.bf16.mxu0 %v2163
        %2462 = vmatmul.mubr.bf16.gmra.mxu0 %v2162
        %v2463 = vpop.f32.mrf.mxu0
        %v2464 = vadd.f32 %v2235, %v2463
        %v2465 = vpop.f32.mrf.mxu0
        %v2466 = vpop.f32.mrf.mxu0
        %v2467 = vadd.f32 %v2235, %v2466
        %v2468 = vpop.f32.mrf.mxu0
        %2469 = vdwg.mxu0
        %2470 = vmatprep.subr.bf16.mxu0 0
        %2471 = vmatpush1.bf16.msra.mxu0 %v2388
        %2472 = vmatprep.subr.bf16.mxu0 0
        %2473 = vmatpush1.bf16.msra.mxu0 %v2387
        %2474 = vmatprep.subr.bf16.mxu0 0
        %2475 = vmatpush1.bf16.msra.mxu0 %v2386
        %2476 = vmatprep.subr.bf16.mxu0 0
        %2477 = vmatpush1.bf16.msra.mxu0 %v2385
        %2478 = vmatprep.subr.bf16.mxu0 0
        %2479 = vmatpush1.bf16.msra.mxu0 %v2384
        %2480 = vmatprep.subr.bf16.mxu0 0
        %2481 = vmatpush1.bf16.msra.mxu0 %v2383
        %2482 = vmatprep.subr.bf16.mxu0 0
        %2483 = vmatpush1.bf16.msra.mxu0 %v2382
        %2484 = vmatprep.subr.bf16.mxu0 0
        %2485 = vmatpush1.bf16.msra.mxu0 %v2381
        %2486 = vmatprep.subr.bf16.mxu0 0
        %2487 = vmatpush2.bf16.msra.mxu0 %v2396
        %2488 = vmatprep.subr.bf16.mxu0 0
        %2489 = vmatpush2.bf16.msra.mxu0 %v2395
        %2490 = vmatprep.subr.bf16.mxu0 0
        %2491 = vmatpush2.bf16.msra.mxu0 %v2394
        %2492 = vmatprep.subr.bf16.mxu0 0
        %2493 = vmatpush2.bf16.msra.mxu0 %v2393
        %2494 = vmatprep.subr.bf16.mxu0 0
        %2495 = vmatpush2.bf16.msra.mxu0 %v2392
        %2496 = vmatprep.subr.bf16.mxu0 0
        %2497 = vmatpush2.bf16.msra.mxu0 %v2391
        %2498 = vmatprep.subr.bf16.mxu0 0
        %2499 = vmatpush2.bf16.msra.mxu0 %v2390
        %2500 = vmatprep.subr.bf16.mxu0 0
        %2501 = vmatpush2.bf16.msra.mxu0 %v2389
        %2502 = vmatprep.mubr.bf16.mxu0 %v2165
        %2503 = vmatmul.mubr.bf16.gmra.mxu0 %v2164
        %v2504 = vpop.f32.mrf.mxu0
        %v2505 = vadd.f32 %v2464, %v2504
        %v2506 = vpop.f32.mrf.mxu0
        %v2507 = vpop.f32.mrf.mxu0
        %v2508 = vadd.f32 %v2467, %v2507
        %v2509 = vpop.f32.mrf.mxu0
        %2510 = vdwg.mxu0
        %v2511 = vadd.f32 %v1747, %v2505
        %v2512 = vadd.f32 %v1748, %v2508
        %2513 = vst [vmem:[#allocation2] sm:$0xff] %v2511
        %2514 = vst [vmem:[#allocation2 + $0x8] sm:$0xff] %v2512
        %p2515 = scmp.eq.s32.totalorder %s32, 3
        // Predicated region
        $region77: #{transformer_encoder.1} parent=71 // pred_check
          %p2516 = pneg %p2515
        $region78: #{transformer_encoder.1} parent=71 // pred_check_branch
          %2518 = sbr.rel (%p2516) target = $region80
        $region79: #{transformer_encoder.1} parent=71 // pred_region
          %v2519 = vld [vmem:[#allocation2] sm:$0xff]
          %v2520 = vld [vmem:[#allocation2 + $0x8] sm:$0xff]
          %2521 = vst [vmem:[%s599] sm:$0xff] %v2519
          %2522 = vst [vmem:[%s599 + $0x8] sm:$0xff] %v2520
        $region80: #{transformer_encoder.1} parent=71 // pred_fallthru
          _
        %s2523 = sand.u32 %s385, 1
        %s2524 = scalar_lea.sflag [#allocation4], %s2523
        %s2525 = sand.u32 %s385, 1
        %s2526 = smul.addr %s2525, 16
        %s2527 = scalar_lea.vmem [#allocation3], %s2526
        // Predicated region
        $region81: #{transformer_encoder.1} parent=71 // pred_check
          %p2528 = pneg %p395
        $region82: #{transformer_encoder.1} parent=71 // pred_check_branch
          %2530 = sbr.rel (%p2528) target = $region84
        $region83: #{transformer_encoder.1} parent=71 // pred_region
          %s2532 = ssub.s32 256, 256
          %2533 = vsyncadd %s2524, %s2532
          %s2534 = smul.addr %s31, 2
          %s2535 = smul.addr %s2534, 128
          %s2536 = scalar_lea.hbm %s13, %s2535
          %s2537 = sshll.u32 %s2527, 4
          %s2538 = int_to_ptr.vmem [resolvable:$true] %s2537
          %2543 = dma.vmem_to_hbm [thread:$0]  %s2538, 256, %s2536, %s2524, 128, 128, 8
        $region84: #{transformer_encoder.1} parent=71 // pred_fallthru
          _
      $region72: #{transformer_encoder.1} parent=5 // pred_fallthru
        _
      %p2544 = scmp.le.s32.totalorder 2, %s22
      // Predicated region
      $region85: #{transformer_encoder.1} parent=5 // pred_check
        %p2545 = pneg %p2544
      $region86: #{transformer_encoder.1} parent=5 // pred_check_branch
        %2547 = sbr.rel (%p2545) target = $region88
      $region87: #{transformer_encoder.1} parent=5 // pred_region
        %s2548 = ssub.s32 %s22, 2
        // Predicated region
        $region89: #{transformer_encoder.1} parent=87 // pred_check
          %p2549 = pneg %p401
        $region90: #{transformer_encoder.1} parent=87 // pred_check_branch
          %2551 = sbr.rel (%p2549) target = $region92
        $region91: #{transformer_encoder.1} parent=87 // pred_region
          %s2552 = sand.u32 %s386, 1
          %s2553 = scalar_lea.sflag [#allocation4], %s2552
          %s2554 = sand.u32 %s386, 1
          %s2555 = smul.addr %s2554, 16
          %s2556 = scalar_lea.vmem [#allocation3], %s2555
          %2557 = dma.done %s2553, 256
        $region92: #{transformer_encoder.1} parent=87 // pred_fallthru
          _
      $region88: #{transformer_encoder.1} parent=5 // pred_fallthru
        _
    $region6: #{transformer_encoder.1} parent=1 // loop_footer
      %s26 = sadd.s32 1, %s22
    $region7: #{transformer_encoder.1} parent=1 // loop_footer_branch
      %21 = sbr.rel target = $region3
    $region8: #{transformer_encoder.1} parent=1 // loop_exit
      _
    %2558 = vsyncpa [#allocation4], 1
    %s2559 = scalar_lea.sflag [#allocation4], 1
    %2560 = vsyncpa %s2559, 1

</llo_original>
